<compile_context>
chip_gen: v7x
topology: tpu7x:2x2x1
jax: 0.10.0
libtpu: 0.0.40
codegen_flags: <defaults>
</compile_context>

<pallas_src>
import functools
import math

import jax
import jax.numpy as jnp
from jax import lax
from jax.experimental import pallas as pl
from jax.experimental.pallas import tpu as pltpu


# ---------------- in-kernel helpers (traced inside the Pallas kernel body) --------------

def _layer_norm(x, g, b, eps=1e-5):
    # PyTorch nn.LayerNorm over last dim, biased variance, eps=1e-5
    mu = jnp.mean(x, axis=-1, keepdims=True)
    var = jnp.mean((x - mu) ** 2, axis=-1, keepdims=True)
    return (x - mu) * lax.rsqrt(var + eps) * g + b


# --------------------------------- Pallas kernel -----------------------------------------

def gpt_layer_kernel(num_heads,
                     x_ref, enc_ref, mask_ref,
                     wqkv1_ref, wo1_ref, wq2_ref, wkv2_ref, wo2_ref,
                     wf1_ref, wf2_ref,
                     bproj_ref, vecs_ref, bf1_ref,
                     o_ref):
    f32 = jnp.float32
    bf16 = jnp.bfloat16

    x = x_ref[...].astype(f32)          # (S, D): one batch element per grid step
    enc = enc_ref[...].astype(f32)      # (S, D)
    S, D = x.shape
    H = num_heads
    hd = D // H

    # ---- unpack small packed vectors ----
    vecs = vecs_ref[...].astype(f32)    # (9, D)
    ln1_g, ln1_b = vecs[0:1], vecs[1:2]
    ln2_g, ln2_b = vecs[2:3], vecs[3:4]
    ln3_g, ln3_b = vecs[4:5], vecs[5:6]
    bo1, bo2, bf2 = vecs[6:7], vecs[7:8], vecs[8:9]
    bf1 = bf1_ref[...].astype(f32)      # (1, F)

    bproj = bproj_ref[...].astype(f32)  # (3, 3D), lane-dense projection biases
    bqkv1 = bproj[0:1, :]               # (1, 3D)  (Q part pre-scaled by 1/sqrt(hd))
    bq2 = bproj[1:2, :D]                # (1, D)   (pre-scaled)
    bkv2 = bproj[2:3, :2 * D]           # (1, 2D)

    mask = mask_ref[...]                # (S, S) additive causal mask (0 / -1e30), f32

    def mm(a, w_ref):
        # single lane-dense 2-D matmul; bf16 MXU operands, f32 accumulation
        return jnp.dot(a.astype(bf16), w_ref[...], preferred_element_type=f32)

    def mha(q, k, v, wo_ref, bo_row):
        # q, k, v: (S, D) f32 with per-head column blocks; 1/sqrt(hd) already folded into q.
        qb, kb, vb = q.astype(bf16), k.astype(bf16), v.astype(bf16)
        ctx_heads = []
        for h in range(H):                       # static loop; H small lane slices
            sl = slice(h * hd, (h + 1) * hd)
            s = jnp.einsum('qd,kd->qk', qb[:, sl], kb[:, sl],
                           preferred_element_type=f32) + mask           # (S, S)
            m = jnp.max(s, axis=-1, keepdims=True)
            p = jnp.exp(s - m)
            p = p * pl.reciprocal(jnp.sum(p, axis=-1, keepdims=True), approx=True)
            ctx_heads.append(jnp.dot(p.astype(bf16), vb[:, sl],
                                     preferred_element_type=f32))        # (S, hd)
        ctx = jnp.concatenate(ctx_heads, axis=-1)                        # (S, D), heads on lanes
        return mm(ctx, wo_ref) + bo_row                                  # single dense out-proj

    # ----- x = LN1(x); masked self-attention; x = LN2(x + attn) -----
    h1 = _layer_norm(x, ln1_g, ln1_b)
    qkv = mm(h1, wqkv1_ref) + bqkv1                                      # (S, 3D), fused QKV
    attn = mha(qkv[:, :D], qkv[:, D:2 * D], qkv[:, 2 * D:], wo1_ref, bo1)
    h2 = _layer_norm(h1 + attn, ln2_g, ln2_b)            # dropout == identity (eval)

    # ----- masked cross-attention (K/V from raw encoder_output); x = LN3(x + attn) -----
    q2 = mm(h2, wq2_ref) + bq2                                           # (S, D)
    kv2 = mm(enc, wkv2_ref) + bkv2                                       # (S, 2D), fused KV
    attn = mha(q2, kv2[:, :D], kv2[:, D:], wo2_ref, bo2)
    h3 = _layer_norm(h2 + attn, ln3_g, ln3_b)

    # ----- feed-forward: x + fc2(ReLU(fc1(x))) -----
    hid = jnp.maximum(mm(h3, wf1_ref) + bf1, 0.0)
    ff = mm(hid, wf2_ref) + bf2

    o_ref[...] = (h3 + ff).astype(o_ref.dtype)
    # TODO(synk): training-mode dropout (random Bernoulli masks) intentionally omitted (eval semantics).


# --------------------------------- wrapper: weight packing --------------------------------

def _pad_row(v, width):
    pad = width - v.shape[0]
    if pad:
        v = jnp.concatenate([v, jnp.zeros((pad,), v.dtype)])
    return v[None, :]


def pack_params(params, num_heads):
    D = params["wq1"].shape[0]
    F = params["wf1"].shape[1]
    hd = D // num_heads
    scale = 1.0 / math.sqrt(hd)     # folded into the Q projections (exact, zero kernel cost)
    bf16 = jnp.bfloat16

    # Lane-concatenated projection weights (bf16 MXU operands, f32 accumulation in kernel).
    wqkv1 = jnp.concatenate([params["wq1"] * scale, params["wk1"], params["wv1"]],
                            axis=1).astype(bf16)                     # (D, 3D)
    wo1 = params["wo1"].astype(bf16)                                 # (D, D)
    wq2 = (params["wq2"] * scale).astype(bf16)                       # (D, D)
    wkv2 = jnp.concatenate([params["wk2"], params["wv2"]], axis=1).astype(bf16)   # (D, 2D)
    wo2 = params["wo2"].astype(bf16)                                 # (D, D)
    wf1 = params["wf1"].astype(bf16)                                 # (D, F)
    wf2 = params["wf2"].astype(bf16)                                 # (F, D)

    # Lane-dense projection biases packed into one (3, 3D) array (rows 1/2 zero-padded).
    bqkv1 = jnp.concatenate([params["bq1"] * scale, params["bk1"], params["bv1"]])
    bq2 = params["bq2"] * scale
    bkv2 = jnp.concatenate([params["bk2"], params["bv2"]])
    bproj = jnp.concatenate([bqkv1[None, :], _pad_row(bq2, 3 * D), _pad_row(bkv2, 3 * D)],
                            axis=0).astype(jnp.float32)              # (3, 3D)

    vecs = jnp.stack([
        params["ln1_g"], params["ln1_b"],
        params["ln2_g"], params["ln2_b"],
        params["ln3_g"], params["ln3_b"],
        params["bo1"], params["bo2"], params["bf2"]], axis=0).astype(jnp.float32)   # (9, D)
    bf1 = params["bf1"].reshape(1, F).astype(jnp.float32)            # (1, F)

    return [wqkv1, wo1, wq2, wkv2, wo2, wf1, wf2, bproj, vecs, bf1]


def gpt_layer(x, enc, params, num_heads):
    bs, S, D = x.shape
    F = params["wf1"].shape[1]
    H = num_heads
    hd = D // H

    # (S, S) additive causal mask precomputed on the host side (zero in-kernel cost).
    idx = jnp.arange(S)
    mask = jnp.where(idx[None, :] <= idx[:, None], 0.0, -1e30).astype(jnp.float32)

    inputs = ([x.reshape(bs * S, D), enc.reshape(bs * S, D), mask]
              + pack_params(params, num_heads))

    const2d = lambda b: (0, 0)                      # weights stay resident across grid steps
    batch_spec = pl.BlockSpec((S, D), lambda b: (b, 0))
    in_specs = [batch_spec, batch_spec] + [pl.BlockSpec(a.shape, const2d) for a in inputs[2:]]

    # Advisory cost hint for XLA scheduling around this tiny custom call.
    flops_proj = 2 * S * D * (3 * D + D + 2 * D + 2 * D)    # QKV1, Q2, KV2, two out-projections
    flops_attn = 2 * (2 * 2 * H * S * S * hd)               # scores + PV, both attention blocks
    flops_ff = 2 * 2 * S * D * F
    flops = bs * (flops_proj + flops_attn + flops_ff)
    transcendentals = bs * (2 * H * S * S + 2 * H * S + 3 * S)
    bytes_accessed = sum(int(a.size) * a.dtype.itemsize for a in inputs) + bs * S * D * 4

    out2d = pl.pallas_call(
        functools.partial(gpt_layer_kernel, num_heads),
        out_shape=jax.ShapeDtypeStruct((bs * S, D), x.dtype),
        grid_spec=pltpu.PrefetchScalarGridSpec(
            num_scalar_prefetch=0,
            grid=(bs,),                                      # per-batch blocks; parallel on v7x
            in_specs=in_specs,
            out_specs=pl.BlockSpec((S, D), lambda b: (b, 0)),
        ),
        compiler_params=pltpu.CompilerParams(
            dimension_semantics=("parallel",)),
        cost_estimate=pl.CostEstimate(
            flops=flops, transcendentals=transcendentals,
            bytes_accessed=bytes_accessed),
    )(*inputs)
    return out2d.reshape(bs, S, D)


# --------------------------------- parameter init -----------------------------------------

def init_params(key, model_dim, num_heads, dim_ff):
    # Synthetic init matching wt_init_: attention projections orthogonal gain=1 (linear),
    # FF orthogonal gain=sqrt(2) (relu), biases zero, LayerNorm gamma=1/beta=0.
    # Weights are stored (in_features, out_features); kernel computes x @ W + b.
    orth = jax.nn.initializers.orthogonal()
    keys = jax.random.split(key, 10)
    g_relu = float(jnp.sqrt(2.0))
    D, F = model_dim, dim_ff
    lin = lambda k, din, dout, gain: gain * orth(k, (din, dout), jnp.float32)
    z = lambda n: jnp.zeros((n,), jnp.float32)
    one = lambda n: jnp.ones((n,), jnp.float32)
    return {
        "ln1_g": one(D), "ln1_b": z(D),
        "wq1": lin(keys[0], D, D, 1.0), "bq1": z(D),
        "wk1": lin(keys[1], D, D, 1.0), "bk1": z(D),
        "wv1": lin(keys[2], D, D, 1.0), "bv1": z(D),
        "wo1": lin(keys[3], D, D, 1.0), "bo1": z(D),
        "ln2_g": one(D), "ln2_b": z(D),
        "wq2": lin(keys[4], D, D, 1.0), "bq2": z(D),
        "wk2": lin(keys[5], D, D, 1.0), "bk2": z(D),
        "wv2": lin(keys[6], D, D, 1.0), "bv2": z(D),
        "wo2": lin(keys[7], D, D, 1.0), "bo2": z(D),
        "ln3_g": one(D), "ln3_b": z(D),
        "wf1": lin(keys[8], D, F, g_relu), "bf1": z(F),
        "wf2": lin(keys[9], F, D, g_relu), "bf2": z(D),
    }


# --------------------------------- main ----------------------------------------------------

if __name__ == "__main__":
    model_dim = 32
    num_heads = 4
    max_agents = 8      # == seq length used here
    dim_ff = 64
    bs = 2
    S = max_agents

    key = jax.random.PRNGKey(0)
    kx, kenc, kp = jax.random.split(key, 3)
    x = jax.random.normal(kx, (bs, S, model_dim), jnp.float32)
    encoder_output = jax.random.normal(kenc, (bs, S, model_dim), jnp.float32)
    params = init_params(kp, model_dim, num_heads, dim_ff)

    out = gpt_layer(x, encoder_output, params, num_heads)
    out = jax.block_until_ready(out)
    assert out.shape == (bs, S, model_dim)
    assert bool(jnp.all(jnp.isfinite(out)))
    print("KERNEL_OK")
</pallas_src>

<mosaic_0001>
module attributes {stable_mosaic.version = 11 : i64} {
  func.func @gpt_layer_kernel(%arg0: i32, %arg1: memref<8x32xf32, #tpu.memory_space<vmem>>, %arg2: memref<8x32xf32, #tpu.memory_space<vmem>>, %arg3: memref<8x8xf32, #tpu.memory_space<vmem>>, %arg4: memref<32x96xbf16, #tpu.memory_space<vmem>>, %arg5: memref<32x32xbf16, #tpu.memory_space<vmem>>, %arg6: memref<32x32xbf16, #tpu.memory_space<vmem>>, %arg7: memref<32x64xbf16, #tpu.memory_space<vmem>>, %arg8: memref<32x32xbf16, #tpu.memory_space<vmem>>, %arg9: memref<32x64xbf16, #tpu.memory_space<vmem>>, %arg10: memref<64x32xbf16, #tpu.memory_space<vmem>>, %arg11: memref<3x96xf32, #tpu.memory_space<vmem>>, %arg12: memref<9x32xf32, #tpu.memory_space<vmem>>, %arg13: memref<1x64xf32, #tpu.memory_space<vmem>>, %arg14: memref<8x32xf32, #tpu.memory_space<vmem>>) attributes {dimension_semantics = [#tpu.dimension_semantics<parallel>], iteration_bounds = array<i64: 2>, scalar_prefetch = 0 : i64, scratch_operands = 0 : i64, tpu.core_type = #tpu.core_type<tc>, window_params = [{transform_indices = @transform_0, window_bounds = array<i64: 8, 32>}, {transform_indices = @transform_1, window_bounds = array<i64: 8, 32>}, {pipeline_mode = #tpu.pipeline_mode<synchronous>, transform_indices = @transform_2, window_bounds = array<i64: 8, 8>}, {pipeline_mode = #tpu.pipeline_mode<synchronous>, transform_indices = @transform_3, window_bounds = array<i64: 32, 96>}, {pipeline_mode = #tpu.pipeline_mode<synchronous>, transform_indices = @transform_4, window_bounds = array<i64: 32, 32>}, {pipeline_mode = #tpu.pipeline_mode<synchronous>, transform_indices = @transform_5, window_bounds = array<i64: 32, 32>}, {pipeline_mode = #tpu.pipeline_mode<synchronous>, transform_indices = @transform_6, window_bounds = array<i64: 32, 64>}, {pipeline_mode = #tpu.pipeline_mode<synchronous>, transform_indices = @transform_7, window_bounds = array<i64: 32, 32>}, {pipeline_mode = #tpu.pipeline_mode<synchronous>, transform_indices = @transform_8, window_bounds = array<i64: 32, 64>}, {pipeline_mode = #tpu.pipeline_mode<synchronous>, transform_indices = @transform_9, window_bounds = array<i64: 64, 32>}, {pipeline_mode = #tpu.pipeline_mode<synchronous>, transform_indices = @transform_10, window_bounds = array<i64: 3, 96>}, {pipeline_mode = #tpu.pipeline_mode<synchronous>, transform_indices = @transform_11, window_bounds = array<i64: 9, 32>}, {pipeline_mode = #tpu.pipeline_mode<synchronous>, transform_indices = @transform_12, window_bounds = array<i64: 1, 64>}, {transform_indices = @transform_13, window_bounds = array<i64: 8, 32>}]} {
    %c0 = arith.constant 0 : index
    %c0_0 = arith.constant 0 : index
    %0 = vector.load %arg1[%c0, %c0_0] : memref<8x32xf32, #tpu.memory_space<vmem>>, vector<8x32xf32>
    %c0_1 = arith.constant 0 : index
    %c0_2 = arith.constant 0 : index
    %1 = vector.load %arg2[%c0_1, %c0_2] : memref<8x32xf32, #tpu.memory_space<vmem>>, vector<8x32xf32>
    %c0_3 = arith.constant 0 : index
    %c0_4 = arith.constant 0 : index
    %2 = vector.load %arg12[%c0_3, %c0_4] : memref<9x32xf32, #tpu.memory_space<vmem>>, vector<9x32xf32>
    %3 = vector.extract_strided_slice %2 {offsets = [0, 0], sizes = [1, 32], strides = [1, 1]} : vector<9x32xf32> to vector<1x32xf32>
    %4 = vector.extract_strided_slice %2 {offsets = [1, 0], sizes = [1, 32], strides = [1, 1]} : vector<9x32xf32> to vector<1x32xf32>
    %5 = vector.extract_strided_slice %2 {offsets = [2, 0], sizes = [1, 32], strides = [1, 1]} : vector<9x32xf32> to vector<1x32xf32>
    %6 = vector.extract_strided_slice %2 {offsets = [3, 0], sizes = [1, 32], strides = [1, 1]} : vector<9x32xf32> to vector<1x32xf32>
    %7 = vector.extract_strided_slice %2 {offsets = [4, 0], sizes = [1, 32], strides = [1, 1]} : vector<9x32xf32> to vector<1x32xf32>
    %8 = vector.extract_strided_slice %2 {offsets = [5, 0], sizes = [1, 32], strides = [1, 1]} : vector<9x32xf32> to vector<1x32xf32>
    %9 = vector.extract_strided_slice %2 {offsets = [6, 0], sizes = [1, 32], strides = [1, 1]} : vector<9x32xf32> to vector<1x32xf32>
    %10 = vector.extract_strided_slice %2 {offsets = [7, 0], sizes = [1, 32], strides = [1, 1]} : vector<9x32xf32> to vector<1x32xf32>
    %11 = vector.extract_strided_slice %2 {offsets = [8, 0], sizes = [1, 32], strides = [1, 1]} : vector<9x32xf32> to vector<1x32xf32>
    %c0_5 = arith.constant 0 : index
    %c0_6 = arith.constant 0 : index
    %12 = vector.load %arg13[%c0_5, %c0_6] : memref<1x64xf32, #tpu.memory_space<vmem>>, vector<1x64xf32>
    %c0_7 = arith.constant 0 : index
    %c0_8 = arith.constant 0 : index
    %13 = vector.load %arg11[%c0_7, %c0_8] : memref<3x96xf32, #tpu.memory_space<vmem>>, vector<3x96xf32>
    %14 = vector.extract_strided_slice %13 {offsets = [0, 0], sizes = [1, 96], strides = [1, 1]} : vector<3x96xf32> to vector<1x96xf32>
    %15 = vector.extract_strided_slice %13 {offsets = [1, 0], sizes = [1, 32], strides = [1, 1]} : vector<3x96xf32> to vector<1x32xf32>
    %16 = vector.extract_strided_slice %13 {offsets = [2, 0], sizes = [1, 64], strides = [1, 1]} : vector<3x96xf32> to vector<1x64xf32>
    %c0_9 = arith.constant 0 : index
    %c0_10 = arith.constant 0 : index
    %17 = vector.load %arg3[%c0_9, %c0_10] : memref<8x8xf32, #tpu.memory_space<vmem>>, vector<8x8xf32>
    %cst = arith.constant dense<0.000000e+00> : vector<8xf32>
    %18 = vector.multi_reduction <add>, %0, %cst [1] : vector<8x32xf32> to vector<8xf32>
    %19 = vector.shape_cast %18 : vector<8xf32> to vector<8x1xf32>
    %cst_11 = arith.constant 3.200000e+01 : f32
    %20 = vector.broadcast %cst_11 : f32 to vector<8x1xf32>
    %21 = arith.divf %19, %20 : vector<8x1xf32>
    %22 = vector.broadcast %21 : vector<8x1xf32> to vector<8x32xf32>
    %23 = arith.subf %0, %22 : vector<8x32xf32>
    %24 = arith.mulf %23, %23 : vector<8x32xf32>
    %cst_12 = arith.constant dense<0.000000e+00> : vector<8xf32>
    %25 = vector.multi_reduction <add>, %24, %cst_12 [1] : vector<8x32xf32> to vector<8xf32>
    %26 = vector.shape_cast %25 : vector<8xf32> to vector<8x1xf32>
    %cst_13 = arith.constant 3.200000e+01 : f32
    %27 = vector.broadcast %cst_13 : f32 to vector<8x1xf32>
    %28 = arith.divf %26, %27 : vector<8x1xf32>
    %29 = vector.broadcast %21 : vector<8x1xf32> to vector<8x32xf32>
    %30 = arith.subf %0, %29 : vector<8x32xf32>
    %cst_14 = arith.constant 9.99999974E-6 : f32
    %31 = vector.broadcast %cst_14 : f32 to vector<8x1xf32>
    %32 = arith.addf %28, %31 : vector<8x1xf32>
    %33 = math.rsqrt %32 : vector<8x1xf32>
    %34 = vector.broadcast %33 : vector<8x1xf32> to vector<8x32xf32>
    %35 = arith.mulf %30, %34 : vector<8x32xf32>
    %36 = vector.broadcast %3 : vector<1x32xf32> to vector<8x32xf32>
    %37 = arith.mulf %35, %36 : vector<8x32xf32>
    %38 = vector.broadcast %4 : vector<1x32xf32> to vector<8x32xf32>
    %39 = arith.addf %37, %38 : vector<8x32xf32>
    %40 = arith.truncf %39 : vector<8x32xf32> to vector<8x32xbf16>
    %c0_15 = arith.constant 0 : index
    %c0_16 = arith.constant 0 : index
    %41 = vector.load %arg4[%c0_15, %c0_16] : memref<32x96xbf16, #tpu.memory_space<vmem>>, vector<32x96xbf16>
    %cst_17 = arith.constant dense<0.000000e+00> : vector<8x96xf32>
    %42 = tpu.matmul %40, %41, %cst_17 {dimension_numbers = #tpu.dot_dimension_numbers<[1], [0], [0], [1], [0, 0, 1, 1], [], []>} : vector<8x32xbf16>, vector<32x96xbf16>, vector<8x96xf32> -> vector<8x96xf32>
    %43 = vector.broadcast %14 : vector<1x96xf32> to vector<8x96xf32>
    %44 = arith.addf %42, %43 : vector<8x96xf32>
    %45 = vector.extract_strided_slice %44 {offsets = [0, 0], sizes = [8, 32], strides = [1, 1]} : vector<8x96xf32> to vector<8x32xf32>
    %46 = vector.extract_strided_slice %44 {offsets = [0, 32], sizes = [8, 32], strides = [1, 1]} : vector<8x96xf32> to vector<8x32xf32>
    %47 = vector.extract_strided_slice %44 {offsets = [0, 64], sizes = [8, 32], strides = [1, 1]} : vector<8x96xf32> to vector<8x32xf32>
    %48 = arith.truncf %45 : vector<8x32xf32> to vector<8x32xbf16>
    %49 = arith.truncf %46 : vector<8x32xf32> to vector<8x32xbf16>
    %50 = arith.truncf %47 : vector<8x32xf32> to vector<8x32xbf16>
    %51 = vector.extract_strided_slice %48 {offsets = [0, 0], sizes = [8, 8], strides = [1, 1]} : vector<8x32xbf16> to vector<8x8xbf16>
    %52 = vector.extract_strided_slice %49 {offsets = [0, 0], sizes = [8, 8], strides = [1, 1]} : vector<8x32xbf16> to vector<8x8xbf16>
    "tpu.trace_start"() <{level = 10 : i32, message = "qd,kd->qk"}> : () -> ()
    %cst_18 = arith.constant dense<0.000000e+00> : vector<8x8xf32>
    %53 = tpu.matmul %51, %52, %cst_18 {dimension_numbers = #tpu.dot_dimension_numbers<[1], [1], [0], [0], [0, 0, 1, 0], [], []>} : vector<8x8xbf16>, vector<8x8xbf16>, vector<8x8xf32> -> vector<8x8xf32>
    "tpu.trace_stop"() : () -> ()
    %54 = arith.addf %53, %17 : vector<8x8xf32>
    %cst_19 = arith.constant dense<0xFF800000> : vector<8xf32>
    %55 = vector.multi_reduction <maximumf>, %54, %cst_19 [1] : vector<8x8xf32> to vector<8xf32>
    %56 = vector.shape_cast %55 : vector<8xf32> to vector<8x1xf32>
    %57 = vector.broadcast %56 : vector<8x1xf32> to vector<8x8xf32>
    %58 = arith.subf %54, %57 : vector<8x8xf32>
    %59 = math.exp %58 : vector<8x8xf32>
    %cst_20 = arith.constant dense<0.000000e+00> : vector<8xf32>
    %60 = vector.multi_reduction <add>, %59, %cst_20 [1] : vector<8x8xf32> to vector<8xf32>
    %61 = vector.shape_cast %60 : vector<8xf32> to vector<8x1xf32>
    %62 = tpu.reciprocal %61 {approx = true} : vector<8x1xf32> -> vector<8x1xf32>
    %63 = vector.broadcast %62 : vector<8x1xf32> to vector<8x8xf32>
    %64 = arith.mulf %59, %63 : vector<8x8xf32>
    %65 = arith.truncf %64 : vector<8x8xf32> to vector<8x8xbf16>
    %66 = vector.extract_strided_slice %50 {offsets = [0, 0], sizes = [8, 8], strides = [1, 1]} : vector<8x32xbf16> to vector<8x8xbf16>
    %cst_21 = arith.constant dense<0.000000e+00> : vector<8x8xf32>
    %67 = tpu.matmul %65, %66, %cst_21 {dimension_numbers = #tpu.dot_dimension_numbers<[1], [0], [0], [1], [0, 0, 1, 1], [], []>} : vector<8x8xbf16>, vector<8x8xbf16>, vector<8x8xf32> -> vector<8x8xf32>
    %68 = vector.extract_strided_slice %48 {offsets = [0, 8], sizes = [8, 8], strides = [1, 1]} : vector<8x32xbf16> to vector<8x8xbf16>
    %69 = vector.extract_strided_slice %49 {offsets = [0, 8], sizes = [8, 8], strides = [1, 1]} : vector<8x32xbf16> to vector<8x8xbf16>
    "tpu.trace_start"() <{level = 10 : i32, message = "qd,kd->qk"}> : () -> ()
    %cst_22 = arith.constant dense<0.000000e+00> : vector<8x8xf32>
    %70 = tpu.matmul %68, %69, %cst_22 {dimension_numbers = #tpu.dot_dimension_numbers<[1], [1], [0], [0], [0, 0, 1, 0], [], []>} : vector<8x8xbf16>, vector<8x8xbf16>, vector<8x8xf32> -> vector<8x8xf32>
    "tpu.trace_stop"() : () -> ()
    %71 = arith.addf %70, %17 : vector<8x8xf32>
    %cst_23 = arith.constant dense<0xFF800000> : vector<8xf32>
    %72 = vector.multi_reduction <maximumf>, %71, %cst_23 [1] : vector<8x8xf32> to vector<8xf32>
    %73 = vector.shape_cast %72 : vector<8xf32> to vector<8x1xf32>
    %74 = vector.broadcast %73 : vector<8x1xf32> to vector<8x8xf32>
    %75 = arith.subf %71, %74 : vector<8x8xf32>
    %76 = math.exp %75 : vector<8x8xf32>
    %cst_24 = arith.constant dense<0.000000e+00> : vector<8xf32>
    %77 = vector.multi_reduction <add>, %76, %cst_24 [1] : vector<8x8xf32> to vector<8xf32>
    %78 = vector.shape_cast %77 : vector<8xf32> to vector<8x1xf32>
    %79 = tpu.reciprocal %78 {approx = true} : vector<8x1xf32> -> vector<8x1xf32>
    %80 = vector.broadcast %79 : vector<8x1xf32> to vector<8x8xf32>
    %81 = arith.mulf %76, %80 : vector<8x8xf32>
    %82 = arith.truncf %81 : vector<8x8xf32> to vector<8x8xbf16>
    %83 = vector.extract_strided_slice %50 {offsets = [0, 8], sizes = [8, 8], strides = [1, 1]} : vector<8x32xbf16> to vector<8x8xbf16>
    %cst_25 = arith.constant dense<0.000000e+00> : vector<8x8xf32>
    %84 = tpu.matmul %82, %83, %cst_25 {dimension_numbers = #tpu.dot_dimension_numbers<[1], [0], [0], [1], [0, 0, 1, 1], [], []>} : vector<8x8xbf16>, vector<8x8xbf16>, vector<8x8xf32> -> vector<8x8xf32>
    %85 = vector.extract_strided_slice %48 {offsets = [0, 16], sizes = [8, 8], strides = [1, 1]} : vector<8x32xbf16> to vector<8x8xbf16>
    %86 = vector.extract_strided_slice %49 {offsets = [0, 16], sizes = [8, 8], strides = [1, 1]} : vector<8x32xbf16> to vector<8x8xbf16>
    "tpu.trace_start"() <{level = 10 : i32, message = "qd,kd->qk"}> : () -> ()
    %cst_26 = arith.constant dense<0.000000e+00> : vector<8x8xf32>
    %87 = tpu.matmul %85, %86, %cst_26 {dimension_numbers = #tpu.dot_dimension_numbers<[1], [1], [0], [0], [0, 0, 1, 0], [], []>} : vector<8x8xbf16>, vector<8x8xbf16>, vector<8x8xf32> -> vector<8x8xf32>
    "tpu.trace_stop"() : () -> ()
    %88 = arith.addf %87, %17 : vector<8x8xf32>
    %cst_27 = arith.constant dense<0xFF800000> : vector<8xf32>
    %89 = vector.multi_reduction <maximumf>, %88, %cst_27 [1] : vector<8x8xf32> to vector<8xf32>
    %90 = vector.shape_cast %89 : vector<8xf32> to vector<8x1xf32>
    %91 = vector.broadcast %90 : vector<8x1xf32> to vector<8x8xf32>
    %92 = arith.subf %88, %91 : vector<8x8xf32>
    %93 = math.exp %92 : vector<8x8xf32>
    %cst_28 = arith.constant dense<0.000000e+00> : vector<8xf32>
    %94 = vector.multi_reduction <add>, %93, %cst_28 [1] : vector<8x8xf32> to vector<8xf32>
    %95 = vector.shape_cast %94 : vector<8xf32> to vector<8x1xf32>
    %96 = tpu.reciprocal %95 {approx = true} : vector<8x1xf32> -> vector<8x1xf32>
    %97 = vector.broadcast %96 : vector<8x1xf32> to vector<8x8xf32>
    %98 = arith.mulf %93, %97 : vector<8x8xf32>
    %99 = arith.truncf %98 : vector<8x8xf32> to vector<8x8xbf16>
    %100 = vector.extract_strided_slice %50 {offsets = [0, 16], sizes = [8, 8], strides = [1, 1]} : vector<8x32xbf16> to vector<8x8xbf16>
    %cst_29 = arith.constant dense<0.000000e+00> : vector<8x8xf32>
    %101 = tpu.matmul %99, %100, %cst_29 {dimension_numbers = #tpu.dot_dimension_numbers<[1], [0], [0], [1], [0, 0, 1, 1], [], []>} : vector<8x8xbf16>, vector<8x8xbf16>, vector<8x8xf32> -> vector<8x8xf32>
    %102 = vector.extract_strided_slice %48 {offsets = [0, 24], sizes = [8, 8], strides = [1, 1]} : vector<8x32xbf16> to vector<8x8xbf16>
    %103 = vector.extract_strided_slice %49 {offsets = [0, 24], sizes = [8, 8], strides = [1, 1]} : vector<8x32xbf16> to vector<8x8xbf16>
    "tpu.trace_start"() <{level = 10 : i32, message = "qd,kd->qk"}> : () -> ()
    %cst_30 = arith.constant dense<0.000000e+00> : vector<8x8xf32>
    %104 = tpu.matmul %102, %103, %cst_30 {dimension_numbers = #tpu.dot_dimension_numbers<[1], [1], [0], [0], [0, 0, 1, 0], [], []>} : vector<8x8xbf16>, vector<8x8xbf16>, vector<8x8xf32> -> vector<8x8xf32>
    "tpu.trace_stop"() : () -> ()
    %105 = arith.addf %104, %17 : vector<8x8xf32>
    %cst_31 = arith.constant dense<0xFF800000> : vector<8xf32>
    %106 = vector.multi_reduction <maximumf>, %105, %cst_31 [1] : vector<8x8xf32> to vector<8xf32>
    %107 = vector.shape_cast %106 : vector<8xf32> to vector<8x1xf32>
    %108 = vector.broadcast %107 : vector<8x1xf32> to vector<8x8xf32>
    %109 = arith.subf %105, %108 : vector<8x8xf32>
    %110 = math.exp %109 : vector<8x8xf32>
    %cst_32 = arith.constant dense<0.000000e+00> : vector<8xf32>
    %111 = vector.multi_reduction <add>, %110, %cst_32 [1] : vector<8x8xf32> to vector<8xf32>
    %112 = vector.shape_cast %111 : vector<8xf32> to vector<8x1xf32>
    %113 = tpu.reciprocal %112 {approx = true} : vector<8x1xf32> -> vector<8x1xf32>
    %114 = vector.broadcast %113 : vector<8x1xf32> to vector<8x8xf32>
    %115 = arith.mulf %110, %114 : vector<8x8xf32>
    %116 = arith.truncf %115 : vector<8x8xf32> to vector<8x8xbf16>
    %117 = vector.extract_strided_slice %50 {offsets = [0, 24], sizes = [8, 8], strides = [1, 1]} : vector<8x32xbf16> to vector<8x8xbf16>
    %cst_33 = arith.constant dense<0.000000e+00> : vector<8x8xf32>
    %118 = tpu.matmul %116, %117, %cst_33 {dimension_numbers = #tpu.dot_dimension_numbers<[1], [0], [0], [1], [0, 0, 1, 1], [], []>} : vector<8x8xbf16>, vector<8x8xbf16>, vector<8x8xf32> -> vector<8x8xf32>
    %119 = tpu.concatenate %67, %84, %101, %118 in 1 : vector<8x8xf32>, vector<8x8xf32>, vector<8x8xf32>, vector<8x8xf32> -> vector<8x32xf32>
    %120 = arith.truncf %119 : vector<8x32xf32> to vector<8x32xbf16>
    %c0_34 = arith.constant 0 : index
    %c0_35 = arith.constant 0 : index
    %121 = vector.load %arg5[%c0_34, %c0_35] : memref<32x32xbf16, #tpu.memory_space<vmem>>, vector<32x32xbf16>
    %cst_36 = arith.constant dense<0.000000e+00> : vector<8x32xf32>
    %122 = tpu.matmul %120, %121, %cst_36 {dimension_numbers = #tpu.dot_dimension_numbers<[1], [0], [0], [1], [0, 0, 1, 1], [], []>} : vector<8x32xbf16>, vector<32x32xbf16>, vector<8x32xf32> -> vector<8x32xf32>
    %123 = vector.broadcast %9 : vector<1x32xf32> to vector<8x32xf32>
    %124 = arith.addf %122, %123 : vector<8x32xf32>
    %125 = arith.addf %39, %124 : vector<8x32xf32>
    %cst_37 = arith.constant dense<0.000000e+00> : vector<8xf32>
    %126 = vector.multi_reduction <add>, %125, %cst_37 [1] : vector<8x32xf32> to vector<8xf32>
    %127 = vector.shape_cast %126 : vector<8xf32> to vector<8x1xf32>
    %cst_38 = arith.constant 3.200000e+01 : f32
    %128 = vector.broadcast %cst_38 : f32 to vector<8x1xf32>
    %129 = arith.divf %127, %128 : vector<8x1xf32>
    %130 = vector.broadcast %129 : vector<8x1xf32> to vector<8x32xf32>
    %131 = arith.subf %125, %130 : vector<8x32xf32>
    %132 = arith.mulf %131, %131 : vector<8x32xf32>
    %cst_39 = arith.constant dense<0.000000e+00> : vector<8xf32>
    %133 = vector.multi_reduction <add>, %132, %cst_39 [1] : vector<8x32xf32> to vector<8xf32>
    %134 = vector.shape_cast %133 : vector<8xf32> to vector<8x1xf32>
    %cst_40 = arith.constant 3.200000e+01 : f32
    %135 = vector.broadcast %cst_40 : f32 to vector<8x1xf32>
    %136 = arith.divf %134, %135 : vector<8x1xf32>
    %137 = vector.broadcast %129 : vector<8x1xf32> to vector<8x32xf32>
    %138 = arith.subf %125, %137 : vector<8x32xf32>
    %cst_41 = arith.constant 9.99999974E-6 : f32
    %139 = vector.broadcast %cst_41 : f32 to vector<8x1xf32>
    %140 = arith.addf %136, %139 : vector<8x1xf32>
    %141 = math.rsqrt %140 : vector<8x1xf32>
    %142 = vector.broadcast %141 : vector<8x1xf32> to vector<8x32xf32>
    %143 = arith.mulf %138, %142 : vector<8x32xf32>
    %144 = vector.broadcast %5 : vector<1x32xf32> to vector<8x32xf32>
    %145 = arith.mulf %143, %144 : vector<8x32xf32>
    %146 = vector.broadcast %6 : vector<1x32xf32> to vector<8x32xf32>
    %147 = arith.addf %145, %146 : vector<8x32xf32>
    %148 = arith.truncf %147 : vector<8x32xf32> to vector<8x32xbf16>
    %c0_42 = arith.constant 0 : index
    %c0_43 = arith.constant 0 : index
    %149 = vector.load %arg6[%c0_42, %c0_43] : memref<32x32xbf16, #tpu.memory_space<vmem>>, vector<32x32xbf16>
    %cst_44 = arith.constant dense<0.000000e+00> : vector<8x32xf32>
    %150 = tpu.matmul %148, %149, %cst_44 {dimension_numbers = #tpu.dot_dimension_numbers<[1], [0], [0], [1], [0, 0, 1, 1], [], []>} : vector<8x32xbf16>, vector<32x32xbf16>, vector<8x32xf32> -> vector<8x32xf32>
    %151 = vector.broadcast %15 : vector<1x32xf32> to vector<8x32xf32>
    %152 = arith.addf %150, %151 : vector<8x32xf32>
    %153 = arith.truncf %1 : vector<8x32xf32> to vector<8x32xbf16>
    %c0_45 = arith.constant 0 : index
    %c0_46 = arith.constant 0 : index
    %154 = vector.load %arg7[%c0_45, %c0_46] : memref<32x64xbf16, #tpu.memory_space<vmem>>, vector<32x64xbf16>
    %cst_47 = arith.constant dense<0.000000e+00> : vector<8x64xf32>
    %155 = tpu.matmul %153, %154, %cst_47 {dimension_numbers = #tpu.dot_dimension_numbers<[1], [0], [0], [1], [0, 0, 1, 1], [], []>} : vector<8x32xbf16>, vector<32x64xbf16>, vector<8x64xf32> -> vector<8x64xf32>
    %156 = vector.broadcast %16 : vector<1x64xf32> to vector<8x64xf32>
    %157 = arith.addf %155, %156 : vector<8x64xf32>
    %158 = vector.extract_strided_slice %157 {offsets = [0, 0], sizes = [8, 32], strides = [1, 1]} : vector<8x64xf32> to vector<8x32xf32>
    %159 = vector.extract_strided_slice %157 {offsets = [0, 32], sizes = [8, 32], strides = [1, 1]} : vector<8x64xf32> to vector<8x32xf32>
    %160 = arith.truncf %152 : vector<8x32xf32> to vector<8x32xbf16>
    %161 = arith.truncf %158 : vector<8x32xf32> to vector<8x32xbf16>
    %162 = arith.truncf %159 : vector<8x32xf32> to vector<8x32xbf16>
    %163 = vector.extract_strided_slice %160 {offsets = [0, 0], sizes = [8, 8], strides = [1, 1]} : vector<8x32xbf16> to vector<8x8xbf16>
    %164 = vector.extract_strided_slice %161 {offsets = [0, 0], sizes = [8, 8], strides = [1, 1]} : vector<8x32xbf16> to vector<8x8xbf16>
    "tpu.trace_start"() <{level = 10 : i32, message = "qd,kd->qk"}> : () -> ()
    %cst_48 = arith.constant dense<0.000000e+00> : vector<8x8xf32>
    %165 = tpu.matmul %163, %164, %cst_48 {dimension_numbers = #tpu.dot_dimension_numbers<[1], [1], [0], [0], [0, 0, 1, 0], [], []>} : vector<8x8xbf16>, vector<8x8xbf16>, vector<8x8xf32> -> vector<8x8xf32>
    "tpu.trace_stop"() : () -> ()
    %166 = arith.addf %165, %17 : vector<8x8xf32>
    %cst_49 = arith.constant dense<0xFF800000> : vector<8xf32>
    %167 = vector.multi_reduction <maximumf>, %166, %cst_49 [1] : vector<8x8xf32> to vector<8xf32>
    %168 = vector.shape_cast %167 : vector<8xf32> to vector<8x1xf32>
    %169 = vector.broadcast %168 : vector<8x1xf32> to vector<8x8xf32>
    %170 = arith.subf %166, %169 : vector<8x8xf32>
    %171 = math.exp %170 : vector<8x8xf32>
    %cst_50 = arith.constant dense<0.000000e+00> : vector<8xf32>
    %172 = vector.multi_reduction <add>, %171, %cst_50 [1] : vector<8x8xf32> to vector<8xf32>
    %173 = vector.shape_cast %172 : vector<8xf32> to vector<8x1xf32>
    %174 = tpu.reciprocal %173 {approx = true} : vector<8x1xf32> -> vector<8x1xf32>
    %175 = vector.broadcast %174 : vector<8x1xf32> to vector<8x8xf32>
    %176 = arith.mulf %171, %175 : vector<8x8xf32>
    %177 = arith.truncf %176 : vector<8x8xf32> to vector<8x8xbf16>
    %178 = vector.extract_strided_slice %162 {offsets = [0, 0], sizes = [8, 8], strides = [1, 1]} : vector<8x32xbf16> to vector<8x8xbf16>
    %cst_51 = arith.constant dense<0.000000e+00> : vector<8x8xf32>
    %179 = tpu.matmul %177, %178, %cst_51 {dimension_numbers = #tpu.dot_dimension_numbers<[1], [0], [0], [1], [0, 0, 1, 1], [], []>} : vector<8x8xbf16>, vector<8x8xbf16>, vector<8x8xf32> -> vector<8x8xf32>
    %180 = vector.extract_strided_slice %160 {offsets = [0, 8], sizes = [8, 8], strides = [1, 1]} : vector<8x32xbf16> to vector<8x8xbf16>
    %181 = vector.extract_strided_slice %161 {offsets = [0, 8], sizes = [8, 8], strides = [1, 1]} : vector<8x32xbf16> to vector<8x8xbf16>
    "tpu.trace_start"() <{level = 10 : i32, message = "qd,kd->qk"}> : () -> ()
    %cst_52 = arith.constant dense<0.000000e+00> : vector<8x8xf32>
    %182 = tpu.matmul %180, %181, %cst_52 {dimension_numbers = #tpu.dot_dimension_numbers<[1], [1], [0], [0], [0, 0, 1, 0], [], []>} : vector<8x8xbf16>, vector<8x8xbf16>, vector<8x8xf32> -> vector<8x8xf32>
    "tpu.trace_stop"() : () -> ()
    %183 = arith.addf %182, %17 : vector<8x8xf32>
    %cst_53 = arith.constant dense<0xFF800000> : vector<8xf32>
    %184 = vector.multi_reduction <maximumf>, %183, %cst_53 [1] : vector<8x8xf32> to vector<8xf32>
    %185 = vector.shape_cast %184 : vector<8xf32> to vector<8x1xf32>
    %186 = vector.broadcast %185 : vector<8x1xf32> to vector<8x8xf32>
    %187 = arith.subf %183, %186 : vector<8x8xf32>
    %188 = math.exp %187 : vector<8x8xf32>
    %cst_54 = arith.constant dense<0.000000e+00> : vector<8xf32>
    %189 = vector.multi_reduction <add>, %188, %cst_54 [1] : vector<8x8xf32> to vector<8xf32>
    %190 = vector.shape_cast %189 : vector<8xf32> to vector<8x1xf32>
    %191 = tpu.reciprocal %190 {approx = true} : vector<8x1xf32> -> vector<8x1xf32>
    %192 = vector.broadcast %191 : vector<8x1xf32> to vector<8x8xf32>
    %193 = arith.mulf %188, %192 : vector<8x8xf32>
    %194 = arith.truncf %193 : vector<8x8xf32> to vector<8x8xbf16>
    %195 = vector.extract_strided_slice %162 {offsets = [0, 8], sizes = [8, 8], strides = [1, 1]} : vector<8x32xbf16> to vector<8x8xbf16>
    %cst_55 = arith.constant dense<0.000000e+00> : vector<8x8xf32>
    %196 = tpu.matmul %194, %195, %cst_55 {dimension_numbers = #tpu.dot_dimension_numbers<[1], [0], [0], [1], [0, 0, 1, 1], [], []>} : vector<8x8xbf16>, vector<8x8xbf16>, vector<8x8xf32> -> vector<8x8xf32>
    %197 = vector.extract_strided_slice %160 {offsets = [0, 16], sizes = [8, 8], strides = [1, 1]} : vector<8x32xbf16> to vector<8x8xbf16>
    %198 = vector.extract_strided_slice %161 {offsets = [0, 16], sizes = [8, 8], strides = [1, 1]} : vector<8x32xbf16> to vector<8x8xbf16>
    "tpu.trace_start"() <{level = 10 : i32, message = "qd,kd->qk"}> : () -> ()
    %cst_56 = arith.constant dense<0.000000e+00> : vector<8x8xf32>
    %199 = tpu.matmul %197, %198, %cst_56 {dimension_numbers = #tpu.dot_dimension_numbers<[1], [1], [0], [0], [0, 0, 1, 0], [], []>} : vector<8x8xbf16>, vector<8x8xbf16>, vector<8x8xf32> -> vector<8x8xf32>
    "tpu.trace_stop"() : () -> ()
    %200 = arith.addf %199, %17 : vector<8x8xf32>
    %cst_57 = arith.constant dense<0xFF800000> : vector<8xf32>
    %201 = vector.multi_reduction <maximumf>, %200, %cst_57 [1] : vector<8x8xf32> to vector<8xf32>
    %202 = vector.shape_cast %201 : vector<8xf32> to vector<8x1xf32>
    %203 = vector.broadcast %202 : vector<8x1xf32> to vector<8x8xf32>
    %204 = arith.subf %200, %203 : vector<8x8xf32>
    %205 = math.exp %204 : vector<8x8xf32>
    %cst_58 = arith.constant dense<0.000000e+00> : vector<8xf32>
    %206 = vector.multi_reduction <add>, %205, %cst_58 [1] : vector<8x8xf32> to vector<8xf32>
    %207 = vector.shape_cast %206 : vector<8xf32> to vector<8x1xf32>
    %208 = tpu.reciprocal %207 {approx = true} : vector<8x1xf32> -> vector<8x1xf32>
    %209 = vector.broadcast %208 : vector<8x1xf32> to vector<8x8xf32>
    %210 = arith.mulf %205, %209 : vector<8x8xf32>
    %211 = arith.truncf %210 : vector<8x8xf32> to vector<8x8xbf16>
    %212 = vector.extract_strided_slice %162 {offsets = [0, 16], sizes = [8, 8], strides = [1, 1]} : vector<8x32xbf16> to vector<8x8xbf16>
    %cst_59 = arith.constant dense<0.000000e+00> : vector<8x8xf32>
    %213 = tpu.matmul %211, %212, %cst_59 {dimension_numbers = #tpu.dot_dimension_numbers<[1], [0], [0], [1], [0, 0, 1, 1], [], []>} : vector<8x8xbf16>, vector<8x8xbf16>, vector<8x8xf32> -> vector<8x8xf32>
    %214 = vector.extract_strided_slice %160 {offsets = [0, 24], sizes = [8, 8], strides = [1, 1]} : vector<8x32xbf16> to vector<8x8xbf16>
    %215 = vector.extract_strided_slice %161 {offsets = [0, 24], sizes = [8, 8], strides = [1, 1]} : vector<8x32xbf16> to vector<8x8xbf16>
    "tpu.trace_start"() <{level = 10 : i32, message = "qd,kd->qk"}> : () -> ()
    %cst_60 = arith.constant dense<0.000000e+00> : vector<8x8xf32>
    %216 = tpu.matmul %214, %215, %cst_60 {dimension_numbers = #tpu.dot_dimension_numbers<[1], [1], [0], [0], [0, 0, 1, 0], [], []>} : vector<8x8xbf16>, vector<8x8xbf16>, vector<8x8xf32> -> vector<8x8xf32>
    "tpu.trace_stop"() : () -> ()
    %217 = arith.addf %216, %17 : vector<8x8xf32>
    %cst_61 = arith.constant dense<0xFF800000> : vector<8xf32>
    %218 = vector.multi_reduction <maximumf>, %217, %cst_61 [1] : vector<8x8xf32> to vector<8xf32>
    %219 = vector.shape_cast %218 : vector<8xf32> to vector<8x1xf32>
    %220 = vector.broadcast %219 : vector<8x1xf32> to vector<8x8xf32>
    %221 = arith.subf %217, %220 : vector<8x8xf32>
    %222 = math.exp %221 : vector<8x8xf32>
    %cst_62 = arith.constant dense<0.000000e+00> : vector<8xf32>
    %223 = vector.multi_reduction <add>, %222, %cst_62 [1] : vector<8x8xf32> to vector<8xf32>
    %224 = vector.shape_cast %223 : vector<8xf32> to vector<8x1xf32>
    %225 = tpu.reciprocal %224 {approx = true} : vector<8x1xf32> -> vector<8x1xf32>
    %226 = vector.broadcast %225 : vector<8x1xf32> to vector<8x8xf32>
    %227 = arith.mulf %222, %226 : vector<8x8xf32>
    %228 = arith.truncf %227 : vector<8x8xf32> to vector<8x8xbf16>
    %229 = vector.extract_strided_slice %162 {offsets = [0, 24], sizes = [8, 8], strides = [1, 1]} : vector<8x32xbf16> to vector<8x8xbf16>
    %cst_63 = arith.constant dense<0.000000e+00> : vector<8x8xf32>
    %230 = tpu.matmul %228, %229, %cst_63 {dimension_numbers = #tpu.dot_dimension_numbers<[1], [0], [0], [1], [0, 0, 1, 1], [], []>} : vector<8x8xbf16>, vector<8x8xbf16>, vector<8x8xf32> -> vector<8x8xf32>
    %231 = tpu.concatenate %179, %196, %213, %230 in 1 : vector<8x8xf32>, vector<8x8xf32>, vector<8x8xf32>, vector<8x8xf32> -> vector<8x32xf32>
    %232 = arith.truncf %231 : vector<8x32xf32> to vector<8x32xbf16>
    %c0_64 = arith.constant 0 : index
    %c0_65 = arith.constant 0 : index
    %233 = vector.load %arg8[%c0_64, %c0_65] : memref<32x32xbf16, #tpu.memory_space<vmem>>, vector<32x32xbf16>
    %cst_66 = arith.constant dense<0.000000e+00> : vector<8x32xf32>
    %234 = tpu.matmul %232, %233, %cst_66 {dimension_numbers = #tpu.dot_dimension_numbers<[1], [0], [0], [1], [0, 0, 1, 1], [], []>} : vector<8x32xbf16>, vector<32x32xbf16>, vector<8x32xf32> -> vector<8x32xf32>
    %235 = vector.broadcast %10 : vector<1x32xf32> to vector<8x32xf32>
    %236 = arith.addf %234, %235 : vector<8x32xf32>
    %237 = arith.addf %147, %236 : vector<8x32xf32>
    %cst_67 = arith.constant dense<0.000000e+00> : vector<8xf32>
    %238 = vector.multi_reduction <add>, %237, %cst_67 [1] : vector<8x32xf32> to vector<8xf32>
    %239 = vector.shape_cast %238 : vector<8xf32> to vector<8x1xf32>
    %cst_68 = arith.constant 3.200000e+01 : f32
    %240 = vector.broadcast %cst_68 : f32 to vector<8x1xf32>
    %241 = arith.divf %239, %240 : vector<8x1xf32>
    %242 = vector.broadcast %241 : vector<8x1xf32> to vector<8x32xf32>
    %243 = arith.subf %237, %242 : vector<8x32xf32>
    %244 = arith.mulf %243, %243 : vector<8x32xf32>
    %cst_69 = arith.constant dense<0.000000e+00> : vector<8xf32>
    %245 = vector.multi_reduction <add>, %244, %cst_69 [1] : vector<8x32xf32> to vector<8xf32>
    %246 = vector.shape_cast %245 : vector<8xf32> to vector<8x1xf32>
    %cst_70 = arith.constant 3.200000e+01 : f32
    %247 = vector.broadcast %cst_70 : f32 to vector<8x1xf32>
    %248 = arith.divf %246, %247 : vector<8x1xf32>
    %249 = vector.broadcast %241 : vector<8x1xf32> to vector<8x32xf32>
    %250 = arith.subf %237, %249 : vector<8x32xf32>
    %cst_71 = arith.constant 9.99999974E-6 : f32
    %251 = vector.broadcast %cst_71 : f32 to vector<8x1xf32>
    %252 = arith.addf %248, %251 : vector<8x1xf32>
    %253 = math.rsqrt %252 : vector<8x1xf32>
    %254 = vector.broadcast %253 : vector<8x1xf32> to vector<8x32xf32>
    %255 = arith.mulf %250, %254 : vector<8x32xf32>
    %256 = vector.broadcast %7 : vector<1x32xf32> to vector<8x32xf32>
    %257 = arith.mulf %255, %256 : vector<8x32xf32>
    %258 = vector.broadcast %8 : vector<1x32xf32> to vector<8x32xf32>
    %259 = arith.addf %257, %258 : vector<8x32xf32>
    %260 = arith.truncf %259 : vector<8x32xf32> to vector<8x32xbf16>
    %c0_72 = arith.constant 0 : index
    %c0_73 = arith.constant 0 : index
    %261 = vector.load %arg9[%c0_72, %c0_73] : memref<32x64xbf16, #tpu.memory_space<vmem>>, vector<32x64xbf16>
    %cst_74 = arith.constant dense<0.000000e+00> : vector<8x64xf32>
    %262 = tpu.matmul %260, %261, %cst_74 {dimension_numbers = #tpu.dot_dimension_numbers<[1], [0], [0], [1], [0, 0, 1, 1], [], []>} : vector<8x32xbf16>, vector<32x64xbf16>, vector<8x64xf32> -> vector<8x64xf32>
    %263 = vector.broadcast %12 : vector<1x64xf32> to vector<8x64xf32>
    %264 = arith.addf %262, %263 : vector<8x64xf32>
    %cst_75 = arith.constant 0.000000e+00 : f32
    %265 = vector.broadcast %cst_75 : f32 to vector<8x64xf32>
    %266 = arith.maximumf %264, %265 : vector<8x64xf32>
    %267 = arith.truncf %266 : vector<8x64xf32> to vector<8x64xbf16>
    %c0_76 = arith.constant 0 : index
    %c0_77 = arith.constant 0 : index
    %268 = vector.load %arg10[%c0_76, %c0_77] : memref<64x32xbf16, #tpu.memory_space<vmem>>, vector<64x32xbf16>
    %cst_78 = arith.constant dense<0.000000e+00> : vector<8x32xf32>
    %269 = tpu.matmul %267, %268, %cst_78 {dimension_numbers = #tpu.dot_dimension_numbers<[1], [0], [0], [1], [0, 0, 1, 1], [], []>} : vector<8x64xbf16>, vector<64x32xbf16>, vector<8x32xf32> -> vector<8x32xf32>
    %270 = vector.broadcast %11 : vector<1x32xf32> to vector<8x32xf32>
    %271 = arith.addf %269, %270 : vector<8x32xf32>
    %272 = arith.addf %259, %271 : vector<8x32xf32>
    %c0_79 = arith.constant 0 : index
    %c0_80 = arith.constant 0 : index
    %273 = vector.load %arg14[%c0_79, %c0_80] : memref<8x32xf32, #tpu.memory_space<vmem>>, vector<8x32xf32>
    tpu.vector_store %arg14[%c0_79, %c0_80], %272 {strides = array<i32>} : memref<8x32xf32, #tpu.memory_space<vmem>>, vector<8x32xf32>,
    return
  }
  func.func @transform_0(%arg0: i32) -> (i32, i32) {
    %c0_i32 = arith.constant 0 : i32
    %c0_i32_0 = arith.constant 0 : i32
    return %arg0, %c0_i32 : i32, i32
  }
  func.func @transform_1(%arg0: i32) -> (i32, i32) {
    %c0_i32 = arith.constant 0 : i32
    %c0_i32_0 = arith.constant 0 : i32
    return %arg0, %c0_i32 : i32, i32
  }
  func.func @transform_2(%arg0: i32) -> (i32, i32) {
    %c0_i32 = arith.constant 0 : i32
    %c0_i32_0 = arith.constant 0 : i32
    %c0_i32_1 = arith.constant 0 : i32
    return %c0_i32, %c0_i32_0 : i32, i32
  }
  func.func @transform_3(%arg0: i32) -> (i32, i32) {
    %c0_i32 = arith.constant 0 : i32
    %c0_i32_0 = arith.constant 0 : i32
    %c0_i32_1 = arith.constant 0 : i32
    return %c0_i32, %c0_i32_0 : i32, i32
  }
  func.func @transform_4(%arg0: i32) -> (i32, i32) {
    %c0_i32 = arith.constant 0 : i32
    %c0_i32_0 = arith.constant 0 : i32
    %c0_i32_1 = arith.constant 0 : i32
    return %c0_i32, %c0_i32_0 : i32, i32
  }
  func.func @transform_5(%arg0: i32) -> (i32, i32) {
    %c0_i32 = arith.constant 0 : i32
    %c0_i32_0 = arith.constant 0 : i32
    %c0_i32_1 = arith.constant 0 : i32
    return %c0_i32, %c0_i32_0 : i32, i32
  }
  func.func @transform_6(%arg0: i32) -> (i32, i32) {
    %c0_i32 = arith.constant 0 : i32
    %c0_i32_0 = arith.constant 0 : i32
    %c0_i32_1 = arith.constant 0 : i32
    return %c0_i32, %c0_i32_0 : i32, i32
  }
  func.func @transform_7(%arg0: i32) -> (i32, i32) {
    %c0_i32 = arith.constant 0 : i32
    %c0_i32_0 = arith.constant 0 : i32
    %c0_i32_1 = arith.constant 0 : i32
    return %c0_i32, %c0_i32_0 : i32, i32
  }
  func.func @transform_8(%arg0: i32) -> (i32, i32) {
    %c0_i32 = arith.constant 0 : i32
    %c0_i32_0 = arith.constant 0 : i32
    %c0_i32_1 = arith.constant 0 : i32
    return %c0_i32, %c0_i32_0 : i32, i32
  }
  func.func @transform_9(%arg0: i32) -> (i32, i32) {
    %c0_i32 = arith.constant 0 : i32
    %c0_i32_0 = arith.constant 0 : i32
    %c0_i32_1 = arith.constant 0 : i32
    return %c0_i32, %c0_i32_0 : i32, i32
  }
  func.func @transform_10(%arg0: i32) -> (i32, i32) {
    %c0_i32 = arith.constant 0 : i32
    %c0_i32_0 = arith.constant 0 : i32
    %c0_i32_1 = arith.constant 0 : i32
    return %c0_i32, %c0_i32_0 : i32, i32
  }
  func.func @transform_11(%arg0: i32) -> (i32, i32) {
    %c0_i32 = arith.constant 0 : i32
    %c0_i32_0 = arith.constant 0 : i32
    %c0_i32_1 = arith.constant 0 : i32
    return %c0_i32, %c0_i32_0 : i32, i32
  }
  func.func @transform_12(%arg0: i32) -> (i32, i32) {
    %c0_i32 = arith.constant 0 : i32
    %c0_i32_0 = arith.constant 0 : i32
    %c0_i32_1 = arith.constant 0 : i32
    return %c0_i32, %c0_i32_0 : i32, i32
  }
  func.func @transform_13(%arg0: i32) -> (i32, i32) {
    %c0_i32 = arith.constant 0 : i32
    %c0_i32_0 = arith.constant 0 : i32
    return %arg0, %c0_i32 : i32, i32
  }
}

</mosaic_0001>

<llo_original>
// kernel: tpu_custom_call.1
$region0: #{tpu_custom_call.1}
  #allocation0 [shape = 'u32[]', space=smem, size = 0x4, offset = 0x4, fixed_abs, tag = 'smem constant byte address 0x4 - core index']
  #allocation1 [shape = 'u32[144,128]{1,0:T(1,128)}', space=vmem, size = 0x12000, scoped, tag = 'internal scratch']
  %s0 = inlined_call_operand.vmem [shape: f32[16,32], index: 0, kind: input, shape index: {}]
  %s1 = inlined_call_operand.vmem [shape: f32[16,32], index: 1, kind: input, shape index: {}]
  %s2 = inlined_call_operand.hbm [shape: f32[8,8], index: 2, kind: input, shape index: {}]
  %s3 = inlined_call_operand.vmem [shape: bf16[32,96], index: 3, kind: input, shape index: {}]
  %s4 = inlined_call_operand.hbm [shape: bf16[32,32], index: 4, kind: input, shape index: {}]
  %s5 = inlined_call_operand.hbm [shape: bf16[32,32], index: 5, kind: input, shape index: {}]
  %s6 = inlined_call_operand.hbm [shape: bf16[32,64], index: 6, kind: input, shape index: {}]
  %s7 = inlined_call_operand.hbm [shape: bf16[32,32], index: 7, kind: input, shape index: {}]
  %s8 = inlined_call_operand.hbm [shape: bf16[32,64], index: 8, kind: input, shape index: {}]
  %s9 = inlined_call_operand.vmem [shape: bf16[64,32], index: 9, kind: input, shape index: {}]
  %s10 = inlined_call_operand.vmem [shape: f32[3,96], index: 10, kind: input, shape index: {}]
  %s11 = inlined_call_operand.vmem [shape: f32[9,32], index: 11, kind: input, shape index: {}]
  %s12 = inlined_call_operand.vmem [shape: f32[1,64], index: 12, kind: input, shape index: {}]
  %s13 = inlined_call_operand.hbm [shape: f32[16,32], index: 13, kind: output, shape index: {}]
  %s14 = sld [smem:[#allocation0]]
  $region109: #{tpu_custom_call.1} parent=0
    _
  %s16 = ssub.s32 1, %s14
  %s17 = scalar_select 0, %s16, %s14
  $region1: #{tpu_custom_call.1} parent=0
    #allocation2 [shape = 'u8[4096]{0}', space=vmem, size = 0x1000, scoped, tag = 'input window, operand 2, single buffered']
    #allocation3 [shape = 's32[2]{0}', space=sflag, size = 0x8, scoped, tag = 'scoped memory for tpu_custom_call.1']
    #allocation4 [shape = 's32[2]{0}', space=sflag, size = 0x8, scoped, tag = 'scoped memory for tpu_custom_call.1']
    #allocation5 [shape = 'u8[8192]{0}', space=vmem, size = 0x2000, scoped, tag = 'input window, operand 4, single buffered']
    #allocation6 [shape = 's32[1]{0}', space=sflag, size = 0x4, scoped, tag = 'scoped memory for tpu_custom_call.1']
    #allocation7 [shape = 'u8[8192]{0}', space=vmem, size = 0x2000, scoped, tag = 'input window, operand 5, single buffered']
    #allocation8 [shape = 'u8[8192]{0}', space=vmem, size = 0x2000, scoped, tag = 'input window, operand 6, single buffered']
    #allocation9 [shape = 's32[1]{0}', space=sflag, size = 0x4, scoped, tag = 'scoped memory for tpu_custom_call.1']
    #allocation10 [shape = 'u8[8192]{0}', space=vmem, size = 0x2000, scoped, tag = 'input window, operand 7, single buffered']
    #allocation11 [shape = 'u8[8192]{0}', space=vmem, size = 0x2000, scoped, tag = 'input window, operand 8, single buffered']
    #allocation12 [shape = 's32[1]{0}', space=sflag, size = 0x4, scoped, tag = 'scoped memory for tpu_custom_call.1']
    #allocation13 [shape = 'u8[8192]{0}', space=vmem, size = 0x2000, scoped, tag = 'output window, operand 0']
    %18 = vsyncpa [#allocation3], 0
    %19 = vsyncpa [#allocation6], 0
    %20 = vsyncpa [#allocation9], 0
    %21 = vsyncpa [#allocation12], 0
    %22 = vsyncpa [#allocation4], 0
    %s23 = scalar_lea.sflag [#allocation4], 1
    %24 = vsyncpa %s23, 0
    loop: start=0, step=1, limit=4
    $region2: #{tpu_custom_call.1} parent=1 // loop_pre_header
      _
    $region3: #{tpu_custom_call.1} parent=1 // loop_header
      %s26 = sphi 0, %s30
      %p27 = scmp.ge.s32.totalorder %s26, 4
      %s36 = sphi 0, %s38
      %s39 = sphi 0, %s36
      %s40 = sphi 0, %s39
      %s56 = sphi 0, %s40
      %s62 = sphi 0, %s64
      %s65 = sphi 0, %s62
      %s66 = sphi 0, %s65
      %s82 = sphi 0, %s66
      %s86 = sphi 0, %s86
      %s88 = sphi 0, %s86
      %s89 = sphi 0, %s88
      %s103 = sphi 0, %s89
      %s107 = sphi 0, %s107
      %s109 = sphi 0, %s107
      %s110 = sphi 0, %s109
      %s124 = sphi 0, %s110
      %s128 = sphi 0, %s128
      %s130 = sphi 0, %s128
      %s131 = sphi 0, %s130
      %s145 = sphi 0, %s131
      %s149 = sphi 0, %s149
      %s151 = sphi 0, %s149
      %s152 = sphi 0, %s151
      %s166 = sphi 0, %s152
      %s170 = sphi 0, %s170
      %s172 = sphi 0, %s170
      %s173 = sphi 0, %s172
      %s187 = sphi 0, %s173
      %s191 = sphi 0, %s191
      %s193 = sphi 0, %s191
      %s194 = sphi 0, %s193
      %s208 = sphi 0, %s194
      %s212 = sphi 0, %s212
      %s214 = sphi 0, %s212
      %s215 = sphi 0, %s214
      %s229 = sphi 0, %s215
      %s233 = sphi 0, %s233
      %s235 = sphi 0, %s233
      %s236 = sphi 0, %s235
      %s250 = sphi 0, %s236
      %s254 = sphi 0, %s254
      %s256 = sphi 0, %s254
      %s257 = sphi 0, %s256
      %s271 = sphi 0, %s257
      %s275 = sphi 0, %s275
      %s277 = sphi 0, %s275
      %s278 = sphi 0, %s277
      %s292 = sphi 0, %s278
      %s296 = sphi 0, %s296
      %s298 = sphi 0, %s296
      %s299 = sphi 0, %s298
      %s313 = sphi 0, %s299
      %s319 = sphi 0, %s321
      %s322 = sphi 0, %s319
      %s323 = sphi 0, %s322
      %s339 = sphi 0, %s323
    $region4: #{tpu_custom_call.1} parent=1 // loop_header_branch
      %29 = sbr.rel (%p27) target = $region8
    $region5: #{tpu_custom_call.1} parent=1 // loop_body
      %s31 = ssub.s32 %s26, 1
      %s32 = ssub.s32 %s26, 2
      %s33 = sadd.s32 %s26, 1
      %s34 = ssub.s32 %s26, %s33
      %p35 = scmp.eq.s32.totalorder %s34, 0
      %s37 = sadd.s32 %s36, 1
      %s38 = scalar_select %p35, %s36, %s37
      %p41 = pneg %p35
      %p42 = scmp.eq.s32.totalorder %s26, 1
      %p43 = por %p41, %p42
      %p44 = scmp.ne.s32.totalorder %s36, %s39
      %p45 = scmp.eq.s32.totalorder %s26, 0
      %p46 = por %p44, %p45
      %p47 = scmp.ne.s32.totalorder %s36, %s39
      %p48 = scmp.eq.s32.totalorder %s31, 1
      %p49 = por %p47, %p48
      %p50 = scmp.ne.s32.totalorder %s39, %s40
      %p51 = scmp.eq.s32.totalorder %s31, 0
      %p52 = por %p50, %p51
      %p53 = scmp.ne.s32.totalorder %s39, %s40
      %p54 = scmp.eq.s32.totalorder %s32, 1
      %p55 = por %p53, %p54
      %p57 = scmp.ne.s32.totalorder %s40, %s56
      %p58 = scmp.eq.s32.totalorder %s32, 0
      %p59 = por %p57, %p58
      %s60 = ssub.s32 %s26, %s33
      %p61 = scmp.eq.s32.totalorder %s60, 0
      %s63 = sadd.s32 %s62, 1
      %s64 = scalar_select %p61, %s62, %s63
      %p67 = pneg %p61
      %p68 = scmp.eq.s32.totalorder %s26, 1
      %p69 = por %p67, %p68
      %p70 = scmp.ne.s32.totalorder %s62, %s65
      %p71 = scmp.eq.s32.totalorder %s26, 0
      %p72 = por %p70, %p71
      %p73 = scmp.ne.s32.totalorder %s62, %s65
      %p74 = scmp.eq.s32.totalorder %s31, 1
      %p75 = por %p73, %p74
      %p76 = scmp.ne.s32.totalorder %s65, %s66
      %p77 = scmp.eq.s32.totalorder %s31, 0
      %p78 = por %p76, %p77
      %p79 = scmp.ne.s32.totalorder %s65, %s66
      %p80 = scmp.eq.s32.totalorder %s32, 1
      %p81 = por %p79, %p80
      %p83 = scmp.ne.s32.totalorder %s66, %s82
      %p84 = scmp.eq.s32.totalorder %s32, 0
      %p85 = por %p83, %p84
      %s87 = sadd.s32 %s86, 1
      %p90 = scmp.eq.s32.totalorder %s26, 1
      %p91 = scmp.ne.s32.totalorder %s86, %s88
      %p92 = scmp.eq.s32.totalorder %s26, 0
      %p93 = por %p91, %p92
      %p94 = scmp.ne.s32.totalorder %s86, %s88
      %p95 = scmp.eq.s32.totalorder %s31, 1
      %p96 = por %p94, %p95
      %p97 = scmp.ne.s32.totalorder %s88, %s89
      %p98 = scmp.eq.s32.totalorder %s31, 0
      %p99 = por %p97, %p98
      %p100 = scmp.ne.s32.totalorder %s88, %s89
      %p101 = scmp.eq.s32.totalorder %s32, 1
      %p102 = por %p100, %p101
      %p104 = scmp.ne.s32.totalorder %s89, %s103
      %p105 = scmp.eq.s32.totalorder %s32, 0
      %p106 = por %p104, %p105
      %s108 = sadd.s32 %s107, 1
      %p111 = scmp.eq.s32.totalorder %s26, 1
      %p112 = scmp.ne.s32.totalorder %s107, %s109
      %p113 = scmp.eq.s32.totalorder %s26, 0
      %p114 = por %p112, %p113
      %p115 = scmp.ne.s32.totalorder %s107, %s109
      %p116 = scmp.eq.s32.totalorder %s31, 1
      %p117 = por %p115, %p116
      %p118 = scmp.ne.s32.totalorder %s109, %s110
      %p119 = scmp.eq.s32.totalorder %s31, 0
      %p120 = por %p118, %p119
      %p121 = scmp.ne.s32.totalorder %s109, %s110
      %p122 = scmp.eq.s32.totalorder %s32, 1
      %p123 = por %p121, %p122
      %p125 = scmp.ne.s32.totalorder %s110, %s124
      %p126 = scmp.eq.s32.totalorder %s32, 0
      %p127 = por %p125, %p126
      %s129 = sadd.s32 %s128, 1
      %p132 = scmp.eq.s32.totalorder %s26, 1
      %p133 = scmp.ne.s32.totalorder %s128, %s130
      %p134 = scmp.eq.s32.totalorder %s26, 0
      %p135 = por %p133, %p134
      %p136 = scmp.ne.s32.totalorder %s128, %s130
      %p137 = scmp.eq.s32.totalorder %s31, 1
      %p138 = por %p136, %p137
      %p139 = scmp.ne.s32.totalorder %s130, %s131
      %p140 = scmp.eq.s32.totalorder %s31, 0
      %p141 = por %p139, %p140
      %p142 = scmp.ne.s32.totalorder %s130, %s131
      %p143 = scmp.eq.s32.totalorder %s32, 1
      %p144 = por %p142, %p143
      %p146 = scmp.ne.s32.totalorder %s131, %s145
      %p147 = scmp.eq.s32.totalorder %s32, 0
      %p148 = por %p146, %p147
      %s150 = sadd.s32 %s149, 1
      %p153 = scmp.eq.s32.totalorder %s26, 1
      %p154 = scmp.ne.s32.totalorder %s149, %s151
      %p155 = scmp.eq.s32.totalorder %s26, 0
      %p156 = por %p154, %p155
      %p157 = scmp.ne.s32.totalorder %s149, %s151
      %p158 = scmp.eq.s32.totalorder %s31, 1
      %p159 = por %p157, %p158
      %p160 = scmp.ne.s32.totalorder %s151, %s152
      %p161 = scmp.eq.s32.totalorder %s31, 0
      %p162 = por %p160, %p161
      %p163 = scmp.ne.s32.totalorder %s151, %s152
      %p164 = scmp.eq.s32.totalorder %s32, 1
      %p165 = por %p163, %p164
      %p167 = scmp.ne.s32.totalorder %s152, %s166
      %p168 = scmp.eq.s32.totalorder %s32, 0
      %p169 = por %p167, %p168
      %s171 = sadd.s32 %s170, 1
      %p174 = scmp.eq.s32.totalorder %s26, 1
      %p175 = scmp.ne.s32.totalorder %s170, %s172
      %p176 = scmp.eq.s32.totalorder %s26, 0
      %p177 = por %p175, %p176
      %p178 = scmp.ne.s32.totalorder %s170, %s172
      %p179 = scmp.eq.s32.totalorder %s31, 1
      %p180 = por %p178, %p179
      %p181 = scmp.ne.s32.totalorder %s172, %s173
      %p182 = scmp.eq.s32.totalorder %s31, 0
      %p183 = por %p181, %p182
      %p184 = scmp.ne.s32.totalorder %s172, %s173
      %p185 = scmp.eq.s32.totalorder %s32, 1
      %p186 = por %p184, %p185
      %p188 = scmp.ne.s32.totalorder %s173, %s187
      %p189 = scmp.eq.s32.totalorder %s32, 0
      %p190 = por %p188, %p189
      %s192 = sadd.s32 %s191, 1
      %p195 = scmp.eq.s32.totalorder %s26, 1
      %p196 = scmp.ne.s32.totalorder %s191, %s193
      %p197 = scmp.eq.s32.totalorder %s26, 0
      %p198 = por %p196, %p197
      %p199 = scmp.ne.s32.totalorder %s191, %s193
      %p200 = scmp.eq.s32.totalorder %s31, 1
      %p201 = por %p199, %p200
      %p202 = scmp.ne.s32.totalorder %s193, %s194
      %p203 = scmp.eq.s32.totalorder %s31, 0
      %p204 = por %p202, %p203
      %p205 = scmp.ne.s32.totalorder %s193, %s194
      %p206 = scmp.eq.s32.totalorder %s32, 1
      %p207 = por %p205, %p206
      %p209 = scmp.ne.s32.totalorder %s194, %s208
      %p210 = scmp.eq.s32.totalorder %s32, 0
      %p211 = por %p209, %p210
      %s213 = sadd.s32 %s212, 1
      %p216 = scmp.eq.s32.totalorder %s26, 1
      %p217 = scmp.ne.s32.totalorder %s212, %s214
      %p218 = scmp.eq.s32.totalorder %s26, 0
      %p219 = por %p217, %p218
      %p220 = scmp.ne.s32.totalorder %s212, %s214
      %p221 = scmp.eq.s32.totalorder %s31, 1
      %p222 = por %p220, %p221
      %p223 = scmp.ne.s32.totalorder %s214, %s215
      %p224 = scmp.eq.s32.totalorder %s31, 0
      %p225 = por %p223, %p224
      %p226 = scmp.ne.s32.totalorder %s214, %s215
      %p227 = scmp.eq.s32.totalorder %s32, 1
      %p228 = por %p226, %p227
      %p230 = scmp.ne.s32.totalorder %s215, %s229
      %p231 = scmp.eq.s32.totalorder %s32, 0
      %p232 = por %p230, %p231
      %s234 = sadd.s32 %s233, 1
      %p237 = scmp.eq.s32.totalorder %s26, 1
      %p238 = scmp.ne.s32.totalorder %s233, %s235
      %p239 = scmp.eq.s32.totalorder %s26, 0
      %p240 = por %p238, %p239
      %p241 = scmp.ne.s32.totalorder %s233, %s235
      %p242 = scmp.eq.s32.totalorder %s31, 1
      %p243 = por %p241, %p242
      %p244 = scmp.ne.s32.totalorder %s235, %s236
      %p245 = scmp.eq.s32.totalorder %s31, 0
      %p246 = por %p244, %p245
      %p247 = scmp.ne.s32.totalorder %s235, %s236
      %p248 = scmp.eq.s32.totalorder %s32, 1
      %p249 = por %p247, %p248
      %p251 = scmp.ne.s32.totalorder %s236, %s250
      %p252 = scmp.eq.s32.totalorder %s32, 0
      %p253 = por %p251, %p252
      %s255 = sadd.s32 %s254, 1
      %p258 = scmp.eq.s32.totalorder %s26, 1
      %p259 = scmp.ne.s32.totalorder %s254, %s256
      %p260 = scmp.eq.s32.totalorder %s26, 0
      %p261 = por %p259, %p260
      %p262 = scmp.ne.s32.totalorder %s254, %s256
      %p263 = scmp.eq.s32.totalorder %s31, 1
      %p264 = por %p262, %p263
      %p265 = scmp.ne.s32.totalorder %s256, %s257
      %p266 = scmp.eq.s32.totalorder %s31, 0
      %p267 = por %p265, %p266
      %p268 = scmp.ne.s32.totalorder %s256, %s257
      %p269 = scmp.eq.s32.totalorder %s32, 1
      %p270 = por %p268, %p269
      %p272 = scmp.ne.s32.totalorder %s257, %s271
      %p273 = scmp.eq.s32.totalorder %s32, 0
      %p274 = por %p272, %p273
      %s276 = sadd.s32 %s275, 1
      %p279 = scmp.eq.s32.totalorder %s26, 1
      %p280 = scmp.ne.s32.totalorder %s275, %s277
      %p281 = scmp.eq.s32.totalorder %s26, 0
      %p282 = por %p280, %p281
      %p283 = scmp.ne.s32.totalorder %s275, %s277
      %p284 = scmp.eq.s32.totalorder %s31, 1
      %p285 = por %p283, %p284
      %p286 = scmp.ne.s32.totalorder %s277, %s278
      %p287 = scmp.eq.s32.totalorder %s31, 0
      %p288 = por %p286, %p287
      %p289 = scmp.ne.s32.totalorder %s277, %s278
      %p290 = scmp.eq.s32.totalorder %s32, 1
      %p291 = por %p289, %p290
      %p293 = scmp.ne.s32.totalorder %s278, %s292
      %p294 = scmp.eq.s32.totalorder %s32, 0
      %p295 = por %p293, %p294
      %s297 = sadd.s32 %s296, 1
      %p300 = scmp.eq.s32.totalorder %s26, 1
      %p301 = scmp.ne.s32.totalorder %s296, %s298
      %p302 = scmp.eq.s32.totalorder %s26, 0
      %p303 = por %p301, %p302
      %p304 = scmp.ne.s32.totalorder %s296, %s298
      %p305 = scmp.eq.s32.totalorder %s31, 1
      %p306 = por %p304, %p305
      %p307 = scmp.ne.s32.totalorder %s298, %s299
      %p308 = scmp.eq.s32.totalorder %s31, 0
      %p309 = por %p307, %p308
      %p310 = scmp.ne.s32.totalorder %s298, %s299
      %p311 = scmp.eq.s32.totalorder %s32, 1
      %p312 = por %p310, %p311
      %p314 = scmp.ne.s32.totalorder %s299, %s313
      %p315 = scmp.eq.s32.totalorder %s32, 0
      %p316 = por %p314, %p315
      %s317 = ssub.s32 %s26, %s33
      %p318 = scmp.eq.s32.totalorder %s317, 0
      %s320 = sadd.s32 %s319, 1
      %s321 = scalar_select %p318, %s319, %s320
      %p324 = pneg %p318
      %p325 = scmp.eq.s32.totalorder %s26, 1
      %p326 = por %p324, %p325
      %p327 = scmp.ne.s32.totalorder %s319, %s322
      %p328 = scmp.eq.s32.totalorder %s26, 0
      %p329 = por %p327, %p328
      %p330 = scmp.ne.s32.totalorder %s319, %s322
      %p331 = scmp.eq.s32.totalorder %s31, 1
      %p332 = por %p330, %p331
      %p333 = scmp.ne.s32.totalorder %s322, %s323
      %p334 = scmp.eq.s32.totalorder %s31, 0
      %p335 = por %p333, %p334
      %p336 = scmp.ne.s32.totalorder %s322, %s323
      %p337 = scmp.eq.s32.totalorder %s32, 1
      %p338 = por %p336, %p337
      %p340 = scmp.ne.s32.totalorder %s323, %s339
      %p341 = scmp.eq.s32.totalorder %s32, 0
      %p342 = por %p340, %p341
      %p343 = scmp.le.s32.totalorder 1, %s26
      %p344 = scmp.lt.s32.totalorder %s26, 3
      %p345 = pnand %p343, %p344
      %p346 = pneg %p345
      // Predicated region
      $region9: #{tpu_custom_call.1} parent=5 // pred_check
        _
      $region10: #{tpu_custom_call.1} parent=5 // pred_check_branch
        %348 = sbr.rel (%p345) target = $region12
      $region11: #{tpu_custom_call.1} parent=5 // pred_region
        %s349 = ssub.s32 %s26, 1
        // Predicated region
        $region13: #{tpu_custom_call.1} parent=11 // pred_check
          %p350 = pneg %p99
        $region14: #{tpu_custom_call.1} parent=11 // pred_check_branch
          %352 = sbr.rel (%p350) target = $region16
        $region15: #{tpu_custom_call.1} parent=11 // pred_region
          %s354 = ssub.s32 128, 128
          %355 = vsyncadd [#allocation3], %s354
          %s357 = sshll.u32 [#allocation2], 4
          %s358 = int_to_ptr.vmem [resolvable:$true] %s357
          %360 = dma.hbm_to_vmem [thread:$0]  %s2, 128, %s358, [#allocation3]
        $region16: #{tpu_custom_call.1} parent=11 // pred_fallthru
          _
        // Predicated region
        $region17: #{tpu_custom_call.1} parent=11 // pred_check
          %p361 = pneg %p120
        $region18: #{tpu_custom_call.1} parent=11 // pred_check_branch
          %363 = sbr.rel (%p361) target = $region20
        $region19: #{tpu_custom_call.1} parent=11 // pred_region
          _
        $region20: #{tpu_custom_call.1} parent=11 // pred_fallthru
          _
        // Predicated region
        $region21: #{tpu_custom_call.1} parent=11 // pred_check
          %p364 = pneg %p141
        $region22: #{tpu_custom_call.1} parent=11 // pred_check_branch
          %366 = sbr.rel (%p364) target = $region24
        $region23: #{tpu_custom_call.1} parent=11 // pred_region
          %s368 = ssub.s32 256, 256
          %369 = vsyncadd [#allocation6], %s368
          %s370 = sshll.u32 [#allocation5], 4
          %s371 = int_to_ptr.vmem [resolvable:$true] %s370
          %376 = dma.hbm_to_vmem [thread:$0]  %s4, 256, %s371, [#allocation6], 64, 64, 4
        $region24: #{tpu_custom_call.1} parent=11 // pred_fallthru
          _
        // Predicated region
        $region25: #{tpu_custom_call.1} parent=11 // pred_check
          %p377 = pneg %p162
        $region26: #{tpu_custom_call.1} parent=11 // pred_check_branch
          %379 = sbr.rel (%p377) target = $region28
        $region27: #{tpu_custom_call.1} parent=11 // pred_region
          %s381 = ssub.s32 256, 256
          %382 = vsyncadd [#allocation6], %s381
          %s383 = sshll.u32 [#allocation7], 4
          %s384 = int_to_ptr.vmem [resolvable:$true] %s383
          %389 = dma.hbm_to_vmem [thread:$0]  %s5, 256, %s384, [#allocation6], 64, 64, 4
        $region28: #{tpu_custom_call.1} parent=11 // pred_fallthru
          _
        // Predicated region
        $region29: #{tpu_custom_call.1} parent=11 // pred_check
          %p390 = pneg %p183
        $region30: #{tpu_custom_call.1} parent=11 // pred_check_branch
          %392 = sbr.rel (%p390) target = $region32
        $region31: #{tpu_custom_call.1} parent=11 // pred_region
          %s394 = ssub.s32 256, 256
          %395 = vsyncadd [#allocation9], %s394
          %s396 = sshll.u32 [#allocation8], 4
          %s397 = int_to_ptr.vmem [resolvable:$true] %s396
          %402 = dma.hbm_to_vmem [thread:$0]  %s6, 256, %s397, [#allocation9], 64, 64, 4
        $region32: #{tpu_custom_call.1} parent=11 // pred_fallthru
          _
        // Predicated region
        $region33: #{tpu_custom_call.1} parent=11 // pred_check
          %p403 = pneg %p204
        $region34: #{tpu_custom_call.1} parent=11 // pred_check_branch
          %405 = sbr.rel (%p403) target = $region36
        $region35: #{tpu_custom_call.1} parent=11 // pred_region
          %s407 = ssub.s32 256, 256
          %408 = vsyncadd [#allocation9], %s407
          %s409 = sshll.u32 [#allocation10], 4
          %s410 = int_to_ptr.vmem [resolvable:$true] %s409
          %415 = dma.hbm_to_vmem [thread:$0]  %s7, 256, %s410, [#allocation9], 64, 64, 4
        $region36: #{tpu_custom_call.1} parent=11 // pred_fallthru
          _
        // Predicated region
        $region37: #{tpu_custom_call.1} parent=11 // pred_check
          %p416 = pneg %p225
        $region38: #{tpu_custom_call.1} parent=11 // pred_check_branch
          %418 = sbr.rel (%p416) target = $region40
        $region39: #{tpu_custom_call.1} parent=11 // pred_region
          %s420 = ssub.s32 256, 256
          %421 = vsyncadd [#allocation12], %s420
          %s422 = sshll.u32 [#allocation11], 4
          %s423 = int_to_ptr.vmem [resolvable:$true] %s422
          %428 = dma.hbm_to_vmem [thread:$0]  %s8, 256, %s423, [#allocation12], 64, 64, 4
        $region40: #{tpu_custom_call.1} parent=11 // pred_fallthru
          _
        // Predicated region
        $region41: #{tpu_custom_call.1} parent=11 // pred_check
          %p429 = pneg %p246
        $region42: #{tpu_custom_call.1} parent=11 // pred_check_branch
          %431 = sbr.rel (%p429) target = $region44
        $region43: #{tpu_custom_call.1} parent=11 // pred_region
          _
        $region44: #{tpu_custom_call.1} parent=11 // pred_fallthru
          _
        // Predicated region
        $region45: #{tpu_custom_call.1} parent=11 // pred_check
          %p432 = pneg %p267
        $region46: #{tpu_custom_call.1} parent=11 // pred_check_branch
          %434 = sbr.rel (%p432) target = $region48
        $region47: #{tpu_custom_call.1} parent=11 // pred_region
          _
        $region48: #{tpu_custom_call.1} parent=11 // pred_fallthru
          _
        // Predicated region
        $region49: #{tpu_custom_call.1} parent=11 // pred_check
          %p435 = pneg %p288
        $region50: #{tpu_custom_call.1} parent=11 // pred_check_branch
          %437 = sbr.rel (%p435) target = $region52
        $region51: #{tpu_custom_call.1} parent=11 // pred_region
          _
        $region52: #{tpu_custom_call.1} parent=11 // pred_fallthru
          _
        // Predicated region
        $region53: #{tpu_custom_call.1} parent=11 // pred_check
          %p438 = pneg %p309
        $region54: #{tpu_custom_call.1} parent=11 // pred_check_branch
          %440 = sbr.rel (%p438) target = $region56
        $region55: #{tpu_custom_call.1} parent=11 // pred_region
          _
        $region56: #{tpu_custom_call.1} parent=11 // pred_fallthru
          _
      $region12: #{tpu_custom_call.1} parent=5 // pred_fallthru
        _
      %p441 = scmp.lt.s32.totalorder %s26, 2
      // Predicated region
      $region57: #{tpu_custom_call.1} parent=5 // pred_check
        %p442 = pneg %p441
      $region58: #{tpu_custom_call.1} parent=5 // pred_check_branch
        %444 = sbr.rel (%p442) target = $region60
      $region59: #{tpu_custom_call.1} parent=5 // pred_region
        // Predicated region
        $region61: #{tpu_custom_call.1} parent=59 // pred_check
          %p445 = pneg %p46
        $region62: #{tpu_custom_call.1} parent=59 // pred_check_branch
          %447 = sbr.rel (%p445) target = $region64
        $region63: #{tpu_custom_call.1} parent=59 // pred_region
          %p448 = scmp.lt.s32.totalorder %s26, 1
          %s449 = scalar_select %p448, %s26, 1
          %s450 = smul.addr %s449, 8
          %s451 = scalar_lea.vmem %s0, %s450
        $region64: #{tpu_custom_call.1} parent=59 // pred_fallthru
          _
        // Predicated region
        $region65: #{tpu_custom_call.1} parent=59 // pred_check
          %p452 = pneg %p72
        $region66: #{tpu_custom_call.1} parent=59 // pred_check_branch
          %454 = sbr.rel (%p452) target = $region68
        $region67: #{tpu_custom_call.1} parent=59 // pred_region
          %p455 = scmp.lt.s32.totalorder %s26, 1
          %s456 = scalar_select %p455, %s26, 1
          %s457 = smul.addr %s456, 8
          %s458 = scalar_lea.vmem %s1, %s457
        $region68: #{tpu_custom_call.1} parent=59 // pred_fallthru
          _
      $region60: #{tpu_custom_call.1} parent=5 // pred_fallthru
        _
      %p459 = scmp.le.s32.totalorder 1, %s26
      %p460 = scmp.lt.s32.totalorder %s26, 3
      %p461 = pnand %p459, %p460
      %p462 = pneg %p461
      // Predicated region
      $region69: #{tpu_custom_call.1} parent=5 // pred_check
        _
      $region70: #{tpu_custom_call.1} parent=5 // pred_check_branch
        %464 = sbr.rel (%p461) target = $region72
      $region71: #{tpu_custom_call.1} parent=5 // pred_region
        %s465 = ssub.s32 %s26, 1
        // Predicated region
        $region73: #{tpu_custom_call.1} parent=71 // pred_check
          %p466 = pneg %p99
        $region74: #{tpu_custom_call.1} parent=71 // pred_check_branch
          %468 = sbr.rel (%p466) target = $region76
        $region75: #{tpu_custom_call.1} parent=71 // pred_region
          %469 = dma.done [#allocation3], 128
        $region76: #{tpu_custom_call.1} parent=71 // pred_fallthru
          _
        // Predicated region
        $region77: #{tpu_custom_call.1} parent=71 // pred_check
          %p470 = pneg %p141
        $region78: #{tpu_custom_call.1} parent=71 // pred_check_branch
          %472 = sbr.rel (%p470) target = $region80
        $region79: #{tpu_custom_call.1} parent=71 // pred_region
          %473 = dma.done [#allocation6], 256
        $region80: #{tpu_custom_call.1} parent=71 // pred_fallthru
          _
        // Predicated region
        $region81: #{tpu_custom_call.1} parent=71 // pred_check
          %p474 = pneg %p162
        $region82: #{tpu_custom_call.1} parent=71 // pred_check_branch
          %476 = sbr.rel (%p474) target = $region84
        $region83: #{tpu_custom_call.1} parent=71 // pred_region
          %477 = dma.done [#allocation6], 256
        $region84: #{tpu_custom_call.1} parent=71 // pred_fallthru
          _
        // Predicated region
        $region85: #{tpu_custom_call.1} parent=71 // pred_check
          %p478 = pneg %p183
        $region86: #{tpu_custom_call.1} parent=71 // pred_check_branch
          %480 = sbr.rel (%p478) target = $region88
        $region87: #{tpu_custom_call.1} parent=71 // pred_region
          %481 = dma.done [#allocation9], 256
        $region88: #{tpu_custom_call.1} parent=71 // pred_fallthru
          _
        // Predicated region
        $region89: #{tpu_custom_call.1} parent=71 // pred_check
          %p482 = pneg %p204
        $region90: #{tpu_custom_call.1} parent=71 // pred_check_branch
          %484 = sbr.rel (%p482) target = $region92
        $region91: #{tpu_custom_call.1} parent=71 // pred_region
          %485 = dma.done [#allocation9], 256
        $region92: #{tpu_custom_call.1} parent=71 // pred_fallthru
          _
        // Predicated region
        $region93: #{tpu_custom_call.1} parent=71 // pred_check
          %p486 = pneg %p225
        $region94: #{tpu_custom_call.1} parent=71 // pred_check_branch
          %488 = sbr.rel (%p486) target = $region96
        $region95: #{tpu_custom_call.1} parent=71 // pred_region
          %489 = dma.done [#allocation12], 256
        $region96: #{tpu_custom_call.1} parent=71 // pred_fallthru
          _
        %p490 = scmp.lt.s32.totalorder %s31, 1
        %s491 = scalar_select %p490, %s31, 1
        %s492 = smul.addr %s491, 8
        %s493 = scalar_lea.vmem %s0, %s492
        %p494 = pneg %p52
        %p495 = pneg %p49
        %p496 = scmp.lt.s32.totalorder %s31, 1
        %s497 = scalar_select %p496, %s31, 1
        %s498 = smul.addr %s497, 8
        %s499 = scalar_lea.vmem %s1, %s498
        %p500 = pneg %p78
        %p501 = pneg %p75
        %p502 = pneg %p99
        %p503 = pneg %p96
        %p504 = pneg %p120
        %p505 = pneg %p117
        %p506 = pneg %p141
        %p507 = pneg %p138
        %p508 = pneg %p162
        %p509 = pneg %p159
        %p510 = pneg %p183
        %p511 = pneg %p180
        %p512 = pneg %p204
        %p513 = pneg %p201
        %p514 = pneg %p225
        %p515 = pneg %p222
        %p516 = pneg %p246
        %p517 = pneg %p243
        %p518 = pneg %p267
        %p519 = pneg %p264
        %p520 = pneg %p288
        %p521 = pneg %p285
        %p522 = pneg %p309
        %p523 = pneg %p306
        %p524 = pneg %p335
        %p525 = pneg %p332
        %s526 = sand.u32 %s322, 1
        %s527 = scalar_lea.sflag [#allocation4], %s526
        %s528 = sand.u32 %s322, 1
        %s529 = smul.addr %s528, 8
        %s530 = scalar_lea.vmem [#allocation13], %s529
        %p531 = scmp.lt.s32.totalorder %s31, 1
        %s532 = scalar_select %p531, %s31, 1
        %s533 = smul.addr %s532, 8
        %s534 = scalar_lea.vmem %s0, %s533
        %p535 = scmp.lt.s32.totalorder %s31, 1
        %s536 = scalar_select %p535, %s31, 1
        %s537 = smul.addr %s536, 8
        %s538 = scalar_lea.vmem %s1, %s537
        %v540 = vld [vmem:[%s534] sm:$0xff]
        %v541 = vld [vmem:[%s538] sm:$0xff]
        %v542 = vld [vmem:[%s11] sm:$0xff]
        %v543 = vld [vmem:[%s11 + $0x8] sm:$0x1]
        %v544 = vld [vmem:[%s12] sm:$0x1]
        %v545 = vld [vmem:[%s10] sm:$0x7]
        %v546 = vld [vmem:[#allocation2] sm:$0xff]
        %vm547 = vcmask 261120
        %v548 = vsel %vm547, %v540, 0.0
        %549 = vadd.xlane.f32.xlu0 %v548
        %v550 = vpop.xlane.xlu0 %549
        %v551 = vrcp.pop 32.0
        %v552 = vmul.f32 %v550, %v551
        %v553 = vsub.f32 %v540, %v552
        %v554 = vmul.f32 %v553, %v553
        %v555 = vsel %vm547, %v554, 0.0
        %556 = vadd.xlane.f32.xlu0 %v555
        %v557 = vpop.xlane.xlu0 %556
        %v558 = vmul.f32 %v557, %v551
        %v559 = vadd.f32 %v558, 1e-05
        %v560 = vrsqrt.pop %v559
        %v561 = vmul.f32 %v553, %v560
        %v562 = vlaneseq
        %v563 = vshrl.u32 %v562, 7
        %v564 = vsub.s32 0, %v563
        %v565 = vrot.slane %v542, %v564
        %v566 = vmul.f32 %v561, %v565
        %v567 = vlaneseq
        %v568 = vshrl.u32 %v567, 7
        %v569 = vsub.s32 1, %v568
        %v570 = vrot.slane %v542, %v569
        %v571 = vadd.f32 %v566, %v570
        %v572 = vpack.c.bf16 %v571, %v571
        %v573 = vld [vmem:[%s3] sm:$0xf]
        %v574 = vld [vmem:[%s3 + $0x4] sm:$0xf]
        %v575 = vld [vmem:[%s3 + $0x8] sm:$0xf]
        %v576 = vld [vmem:[%s3 + $0xc] sm:$0xf]
        %v577 = vlaneseq
        %v578 = vshrl.u32 %v577, 7
        %v579 = vsub.s32 0, %v578
        %v580 = vrot.slane %v545, %v579
        %v585 = vunpack.c.l.b16 %v573
        %v586 = vunpack.c.l.b16 %v574
        %v587 = vunpack.c.l.b16 %v575
        %v588 = vunpack.c.l.b16 %v576
        %v589 = vpack.c.b16 %v586, %v585
        %v590 = vpack.c.b16 %v588, %v587
        %v594 = vsel %vm547, %v572, 0
        %596 = vmatprep.subr.bf16.mxu0 0
        %597 = vmatpush1.bf16.msra.mxu0 %v589
        %598 = vmatprep.subr.bf16.mxu0 0
        %599 = vmatpush1.bf16.msra.mxu0 %v590
        %600 = vmatprep.subr.bf16.mxu0 0
        %601 = vmatpush1.bf16.msra.mxu0 0
        %602 = vmatprep.subr.bf16.mxu0 0
        %603 = vmatpush1.bf16.msra.mxu0 0
        %604 = vmatprep.subr.bf16.mxu0 0
        %605 = vmatpush1.bf16.msra.mxu0 0
        %606 = vmatprep.subr.bf16.mxu0 0
        %607 = vmatpush1.bf16.msra.mxu0 0
        %608 = vmatprep.subr.bf16.mxu0 0
        %609 = vmatpush1.bf16.msra.mxu0 0
        %610 = vmatprep.subr.bf16.mxu0 0
        %611 = vmatpush1.bf16.msra.mxu0 0
        %612 = vmatprep.subr.bf16.mxu0 0
        %613 = vmatpush1.bf16.msra.mxu0 0
        %614 = vmatprep.subr.bf16.mxu0 0
        %615 = vmatpush1.bf16.msra.mxu0 0
        %616 = vmatprep.subr.bf16.mxu0 0
        %617 = vmatpush1.bf16.msra.mxu0 0
        %618 = vmatprep.subr.bf16.mxu0 0
        %619 = vmatpush1.bf16.msra.mxu0 0
        %620 = vmatprep.subr.bf16.mxu0 0
        %621 = vmatpush1.bf16.msra.mxu0 0
        %622 = vmatprep.subr.bf16.mxu0 0
        %623 = vmatpush1.bf16.msra.mxu0 0
        %624 = vmatprep.subr.bf16.mxu0 0
        %625 = vmatpush1.bf16.msra.mxu0 0
        %626 = vmatprep.subr.bf16.mxu0 0
        %627 = vmatpush1.bf16.msra.mxu0 0
        %628 = vmatprep.mubr.bf16.mxu0 0
        %629 = vmatmul.mubr.bf16.gmra.mrb[0].mxu0 %v594
        %v630 = vpop.f32.mrb[0].mxu0
        %v631 = vadd.f32 %v580, %v630
        %v632 = vpop.f32.mrb[0].mxu0
        %v633 = vpop.f32.mrb[0].mxu0
        %v634 = vpop.f32.mrb[0].mxu0
        %635 = vdwg.mxu0
        %v636 = vpack.c.bf16 %v631, %v631
        %638 = vrot.lane.b32.xlu0 %v636, 96
        %v639 = vpop.permute.xlu0 %638
        %vm640 = vcmask 64512
        %v642 = vsel %vm640, %v636, 0
        %v645 = vsel %vm640, %v639, 0
        %647 = vmatprep.subr.bf16.mxu0 0
        %648 = vmatpush1.bf16.xpose.msra.mxu0 %v645
        %649 = vmatprep.subr.bf16.mxu0 0
        %650 = vmatpush1.bf16.xpose.msra.mxu0 0
        %651 = vmatprep.subr.bf16.mxu0 0
        %652 = vmatpush1.bf16.xpose.msra.mxu0 0
        %653 = vmatprep.subr.bf16.mxu0 0
        %654 = vmatpush1.bf16.xpose.msra.mxu0 0
        %655 = vmatprep.subr.bf16.mxu0 0
        %656 = vmatpush1.bf16.xpose.msra.mxu0 0
        %657 = vmatprep.subr.bf16.mxu0 0
        %658 = vmatpush1.bf16.xpose.msra.mxu0 0
        %659 = vmatprep.subr.bf16.mxu0 0
        %660 = vmatpush1.bf16.xpose.msra.mxu0 0
        %661 = vmatprep.subr.bf16.mxu0 0
        %662 = vmatpush1.bf16.xpose.msra.mxu0 0
        %663 = vmatprep.subr.bf16.mxu0 0
        %664 = vmatpush1.bf16.xpose.msra.mxu0 0
        %665 = vmatprep.subr.bf16.mxu0 0
        %666 = vmatpush1.bf16.xpose.msra.mxu0 0
        %667 = vmatprep.subr.bf16.mxu0 0
        %668 = vmatpush1.bf16.xpose.msra.mxu0 0
        %669 = vmatprep.subr.bf16.mxu0 0
        %670 = vmatpush1.bf16.xpose.msra.mxu0 0
        %671 = vmatprep.subr.bf16.mxu0 0
        %672 = vmatpush1.bf16.xpose.msra.mxu0 0
        %673 = vmatprep.subr.bf16.mxu0 0
        %674 = vmatpush1.bf16.xpose.msra.mxu0 0
        %675 = vmatprep.subr.bf16.mxu0 0
        %676 = vmatpush1.bf16.xpose.msra.mxu0 0
        %677 = vmatprep.subr.bf16.mxu0 0
        %678 = vmatpush1.bf16.xpose.msra.mxu0 0
        %679 = vmatprep.mubr.bf16.mxu0 0
        %680 = vmatmul.mubr.bf16.gmra.mrb[0].mxu0 %v642
        %v681 = vpop.f32.mrb[0].mxu0
        %v682 = vadd.f32 %v546, %v681
        %v683 = vpop.f32.mrb[0].mxu0
        %v684 = vpop.f32.mrb[0].mxu0
        %v685 = vpop.f32.mrb[0].mxu0
        %686 = vdwg.mxu0
        %v687 = vsel %vm640, %v682, -inf
        %688 = vmax.xlane.f32.xlu0 %v687
        %v689 = vpop.xlane.xlu0 %688
        %v690 = vsub.f32 %v682, %v689
        %v691 = vmul.f32 %v690, 1.442695
        %v692 = vpow.pop %v691
        %v693 = vsel %vm640, %v692, 0.0
        %694 = vadd.xlane.f32.xlu0 %v693
        %v695 = vpop.xlane.xlu0 %694
        %v696 = vrcp.pop %v695
        %v697 = vmul.f32 %v692, %v696
        %v698 = vpack.c.bf16 %v697, %v697
        %699 = vrot.lane.b32.xlu0 %v636, 64
        %v700 = vpop.permute.xlu0 %699
        %v702 = vsel %vm640, %v698, 0
        %vm704 = vcmask 1043456
        %v706 = vsel %vm704, %v700, 0
        %708 = vmatprep.subr.bf16.mxu0 0
        %709 = vmatpush1.bf16.msra.mxu0 %v706
        %710 = vmatprep.subr.bf16.mxu0 0
        %711 = vmatpush1.bf16.msra.mxu0 0
        %712 = vmatprep.subr.bf16.mxu0 0
        %713 = vmatpush1.bf16.msra.mxu0 0
        %714 = vmatprep.subr.bf16.mxu0 0
        %715 = vmatpush1.bf16.msra.mxu0 0
        %716 = vmatprep.subr.bf16.mxu0 0
        %717 = vmatpush1.bf16.msra.mxu0 0
        %718 = vmatprep.subr.bf16.mxu0 0
        %719 = vmatpush1.bf16.msra.mxu0 0
        %720 = vmatprep.subr.bf16.mxu0 0
        %721 = vmatpush1.bf16.msra.mxu0 0
        %722 = vmatprep.subr.bf16.mxu0 0
        %723 = vmatpush1.bf16.msra.mxu0 0
        %724 = vmatprep.subr.bf16.mxu0 0
        %725 = vmatpush1.bf16.msra.mxu0 0
        %726 = vmatprep.subr.bf16.mxu0 0
        %727 = vmatpush1.bf16.msra.mxu0 0
        %728 = vmatprep.subr.bf16.mxu0 0
        %729 = vmatpush1.bf16.msra.mxu0 0
        %730 = vmatprep.subr.bf16.mxu0 0
        %731 = vmatpush1.bf16.msra.mxu0 0
        %732 = vmatprep.subr.bf16.mxu0 0
        %733 = vmatpush1.bf16.msra.mxu0 0
        %734 = vmatprep.subr.bf16.mxu0 0
        %735 = vmatpush1.bf16.msra.mxu0 0
        %736 = vmatprep.subr.bf16.mxu0 0
        %737 = vmatpush1.bf16.msra.mxu0 0
        %738 = vmatprep.subr.bf16.mxu0 0
        %739 = vmatpush1.bf16.msra.mxu0 0
        %740 = vmatprep.mubr.bf16.mxu0 0
        %741 = vmatmul.mubr.bf16.gmra.mrb[0].mxu0 %v702
        %v742 = vpop.f32.mrb[0].mxu0
        %v743 = vadd.f32 0.0, %v742
        %v744 = vpop.f32.mrb[0].mxu0
        %v745 = vpop.f32.mrb[0].mxu0
        %v746 = vpop.f32.mrb[0].mxu0
        %747 = vdwg.mxu0
        %748 = vrot.lane.b32.xlu0 %v636, 120
        %v749 = vpop.permute.xlu0 %748
        %750 = vrot.lane.b32.xlu0 %v636, 88
        %v751 = vpop.permute.xlu0 %750
        %v753 = vsel %vm640, %v749, 0
        %v756 = vsel %vm640, %v751, 0
        %758 = vmatprep.subr.bf16.mxu0 0
        %759 = vmatpush1.bf16.xpose.msra.mxu0 %v756
        %760 = vmatprep.subr.bf16.mxu0 0
        %761 = vmatpush1.bf16.xpose.msra.mxu0 0
        %762 = vmatprep.subr.bf16.mxu0 0
        %763 = vmatpush1.bf16.xpose.msra.mxu0 0
        %764 = vmatprep.subr.bf16.mxu0 0
        %765 = vmatpush1.bf16.xpose.msra.mxu0 0
        %766 = vmatprep.subr.bf16.mxu0 0
        %767 = vmatpush1.bf16.xpose.msra.mxu0 0
        %768 = vmatprep.subr.bf16.mxu0 0
        %769 = vmatpush1.bf16.xpose.msra.mxu0 0
        %770 = vmatprep.subr.bf16.mxu0 0
        %771 = vmatpush1.bf16.xpose.msra.mxu0 0
        %772 = vmatprep.subr.bf16.mxu0 0
        %773 = vmatpush1.bf16.xpose.msra.mxu0 0
        %774 = vmatprep.subr.bf16.mxu0 0
        %775 = vmatpush1.bf16.xpose.msra.mxu0 0
        %776 = vmatprep.subr.bf16.mxu0 0
        %777 = vmatpush1.bf16.xpose.msra.mxu0 0
        %778 = vmatprep.subr.bf16.mxu0 0
        %779 = vmatpush1.bf16.xpose.msra.mxu0 0
        %780 = vmatprep.subr.bf16.mxu0 0
        %781 = vmatpush1.bf16.xpose.msra.mxu0 0
        %782 = vmatprep.subr.bf16.mxu0 0
        %783 = vmatpush1.bf16.xpose.msra.mxu0 0
        %784 = vmatprep.subr.bf16.mxu0 0
        %785 = vmatpush1.bf16.xpose.msra.mxu0 0
        %786 = vmatprep.subr.bf16.mxu0 0
        %787 = vmatpush1.bf16.xpose.msra.mxu0 0
        %788 = vmatprep.subr.bf16.mxu0 0
        %789 = vmatpush1.bf16.xpose.msra.mxu0 0
        %790 = vmatprep.mubr.bf16.mxu0 0
        %791 = vmatmul.mubr.bf16.gmra.mrb[0].mxu0 %v753
        %v792 = vpop.f32.mrb[0].mxu0
        %v793 = vadd.f32 %v546, %v792
        %v794 = vpop.f32.mrb[0].mxu0
        %v795 = vpop.f32.mrb[0].mxu0
        %v796 = vpop.f32.mrb[0].mxu0
        %797 = vdwg.mxu0
        %v798 = vsel %vm640, %v793, -inf
        %799 = vmax.xlane.f32.xlu0 %v798
        %v800 = vpop.xlane.xlu0 %799
        %v801 = vsub.f32 %v793, %v800
        %v802 = vmul.f32 %v801, 1.442695
        %v803 = vpow.pop %v802
        %v804 = vsel %vm640, %v803, 0.0
        %805 = vadd.xlane.f32.xlu0 %v804
        %v806 = vpop.xlane.xlu0 %805
        %v807 = vrcp.pop %v806
        %v808 = vmul.f32 %v803, %v807
        %v809 = vpack.c.bf16 %v808, %v808
        %810 = vrot.lane.b32.xlu0 %v636, 56
        %v811 = vpop.permute.xlu0 %810
        %v813 = vsel %vm640, %v809, 0
        %v816 = vsel %vm704, %v811, 0
        %818 = vmatprep.subr.bf16.mxu0 0
        %819 = vmatpush1.bf16.msra.mxu0 %v816
        %820 = vmatprep.subr.bf16.mxu0 0
        %821 = vmatpush1.bf16.msra.mxu0 0
        %822 = vmatprep.subr.bf16.mxu0 0
        %823 = vmatpush1.bf16.msra.mxu0 0
        %824 = vmatprep.subr.bf16.mxu0 0
        %825 = vmatpush1.bf16.msra.mxu0 0
        %826 = vmatprep.subr.bf16.mxu0 0
        %827 = vmatpush1.bf16.msra.mxu0 0
        %828 = vmatprep.subr.bf16.mxu0 0
        %829 = vmatpush1.bf16.msra.mxu0 0
        %830 = vmatprep.subr.bf16.mxu0 0
        %831 = vmatpush1.bf16.msra.mxu0 0
        %832 = vmatprep.subr.bf16.mxu0 0
        %833 = vmatpush1.bf16.msra.mxu0 0
        %834 = vmatprep.subr.bf16.mxu0 0
        %835 = vmatpush1.bf16.msra.mxu0 0
        %836 = vmatprep.subr.bf16.mxu0 0
        %837 = vmatpush1.bf16.msra.mxu0 0
        %838 = vmatprep.subr.bf16.mxu0 0
        %839 = vmatpush1.bf16.msra.mxu0 0
        %840 = vmatprep.subr.bf16.mxu0 0
        %841 = vmatpush1.bf16.msra.mxu0 0
        %842 = vmatprep.subr.bf16.mxu0 0
        %843 = vmatpush1.bf16.msra.mxu0 0
        %844 = vmatprep.subr.bf16.mxu0 0
        %845 = vmatpush1.bf16.msra.mxu0 0
        %846 = vmatprep.subr.bf16.mxu0 0
        %847 = vmatpush1.bf16.msra.mxu0 0
        %848 = vmatprep.subr.bf16.mxu0 0
        %849 = vmatpush1.bf16.msra.mxu0 0
        %850 = vmatprep.mubr.bf16.mxu0 0
        %851 = vmatmul.mubr.bf16.gmra.mrb[0].mxu0 %v813
        %v852 = vpop.f32.mrb[0].mxu0
        %v853 = vadd.f32 0.0, %v852
        %v854 = vpop.f32.mrb[0].mxu0
        %v855 = vpop.f32.mrb[0].mxu0
        %v856 = vpop.f32.mrb[0].mxu0
        %857 = vdwg.mxu0
        %858 = vrot.lane.b32.xlu0 %v636, 112
        %v859 = vpop.permute.xlu0 %858
        %860 = vrot.lane.b32.xlu0 %v636, 80
        %v861 = vpop.permute.xlu0 %860
        %v863 = vsel %vm640, %v859, 0
        %v866 = vsel %vm640, %v861, 0
        %868 = vmatprep.subr.bf16.mxu0 0
        %869 = vmatpush1.bf16.xpose.msra.mxu0 %v866
        %870 = vmatprep.subr.bf16.mxu0 0
        %871 = vmatpush1.bf16.xpose.msra.mxu0 0
        %872 = vmatprep.subr.bf16.mxu0 0
        %873 = vmatpush1.bf16.xpose.msra.mxu0 0
        %874 = vmatprep.subr.bf16.mxu0 0
        %875 = vmatpush1.bf16.xpose.msra.mxu0 0
        %876 = vmatprep.subr.bf16.mxu0 0
        %877 = vmatpush1.bf16.xpose.msra.mxu0 0
        %878 = vmatprep.subr.bf16.mxu0 0
        %879 = vmatpush1.bf16.xpose.msra.mxu0 0
        %880 = vmatprep.subr.bf16.mxu0 0
        %881 = vmatpush1.bf16.xpose.msra.mxu0 0
        %882 = vmatprep.subr.bf16.mxu0 0
        %883 = vmatpush1.bf16.xpose.msra.mxu0 0
        %884 = vmatprep.subr.bf16.mxu0 0
        %885 = vmatpush1.bf16.xpose.msra.mxu0 0
        %886 = vmatprep.subr.bf16.mxu0 0
        %887 = vmatpush1.bf16.xpose.msra.mxu0 0
        %888 = vmatprep.subr.bf16.mxu0 0
        %889 = vmatpush1.bf16.xpose.msra.mxu0 0
        %890 = vmatprep.subr.bf16.mxu0 0
        %891 = vmatpush1.bf16.xpose.msra.mxu0 0
        %892 = vmatprep.subr.bf16.mxu0 0
        %893 = vmatpush1.bf16.xpose.msra.mxu0 0
        %894 = vmatprep.subr.bf16.mxu0 0
        %895 = vmatpush1.bf16.xpose.msra.mxu0 0
        %896 = vmatprep.subr.bf16.mxu0 0
        %897 = vmatpush1.bf16.xpose.msra.mxu0 0
        %898 = vmatprep.subr.bf16.mxu0 0
        %899 = vmatpush1.bf16.xpose.msra.mxu0 0
        %900 = vmatprep.mubr.bf16.mxu0 0
        %901 = vmatmul.mubr.bf16.gmra.mrb[0].mxu0 %v863
        %v902 = vpop.f32.mrb[0].mxu0
        %v903 = vadd.f32 %v546, %v902
        %v904 = vpop.f32.mrb[0].mxu0
        %v905 = vpop.f32.mrb[0].mxu0
        %v906 = vpop.f32.mrb[0].mxu0
        %907 = vdwg.mxu0
        %v908 = vsel %vm640, %v903, -inf
        %909 = vmax.xlane.f32.xlu0 %v908
        %v910 = vpop.xlane.xlu0 %909
        %v911 = vsub.f32 %v903, %v910
        %v912 = vmul.f32 %v911, 1.442695
        %v913 = vpow.pop %v912
        %v914 = vsel %vm640, %v913, 0.0
        %915 = vadd.xlane.f32.xlu0 %v914
        %v916 = vpop.xlane.xlu0 %915
        %v917 = vrcp.pop %v916
        %v918 = vmul.f32 %v913, %v917
        %v919 = vpack.c.bf16 %v918, %v918
        %920 = vrot.lane.b32.xlu0 %v636, 48
        %v921 = vpop.permute.xlu0 %920
        %v923 = vsel %vm640, %v919, 0
        %v926 = vsel %vm704, %v921, 0
        %928 = vmatprep.subr.bf16.mxu0 0
        %929 = vmatpush1.bf16.msra.mxu0 %v926
        %930 = vmatprep.subr.bf16.mxu0 0
        %931 = vmatpush1.bf16.msra.mxu0 0
        %932 = vmatprep.subr.bf16.mxu0 0
        %933 = vmatpush1.bf16.msra.mxu0 0
        %934 = vmatprep.subr.bf16.mxu0 0
        %935 = vmatpush1.bf16.msra.mxu0 0
        %936 = vmatprep.subr.bf16.mxu0 0
        %937 = vmatpush1.bf16.msra.mxu0 0
        %938 = vmatprep.subr.bf16.mxu0 0
        %939 = vmatpush1.bf16.msra.mxu0 0
        %940 = vmatprep.subr.bf16.mxu0 0
        %941 = vmatpush1.bf16.msra.mxu0 0
        %942 = vmatprep.subr.bf16.mxu0 0
        %943 = vmatpush1.bf16.msra.mxu0 0
        %944 = vmatprep.subr.bf16.mxu0 0
        %945 = vmatpush1.bf16.msra.mxu0 0
        %946 = vmatprep.subr.bf16.mxu0 0
        %947 = vmatpush1.bf16.msra.mxu0 0
        %948 = vmatprep.subr.bf16.mxu0 0
        %949 = vmatpush1.bf16.msra.mxu0 0
        %950 = vmatprep.subr.bf16.mxu0 0
        %951 = vmatpush1.bf16.msra.mxu0 0
        %952 = vmatprep.subr.bf16.mxu0 0
        %953 = vmatpush1.bf16.msra.mxu0 0
        %954 = vmatprep.subr.bf16.mxu0 0
        %955 = vmatpush1.bf16.msra.mxu0 0
        %956 = vmatprep.subr.bf16.mxu0 0
        %957 = vmatpush1.bf16.msra.mxu0 0
        %958 = vmatprep.subr.bf16.mxu0 0
        %959 = vmatpush1.bf16.msra.mxu0 0
        %960 = vmatprep.mubr.bf16.mxu0 0
        %961 = vmatmul.mubr.bf16.gmra.mrb[0].mxu0 %v923
        %v962 = vpop.f32.mrb[0].mxu0
        %v963 = vadd.f32 0.0, %v962
        %v964 = vpop.f32.mrb[0].mxu0
        %v965 = vpop.f32.mrb[0].mxu0
        %v966 = vpop.f32.mrb[0].mxu0
        %967 = vdwg.mxu0
        %968 = vrot.lane.b32.xlu0 %v636, 104
        %v969 = vpop.permute.xlu0 %968
        %970 = vrot.lane.b32.xlu0 %v636, 72
        %v971 = vpop.permute.xlu0 %970
        %v973 = vsel %vm640, %v969, 0
        %v976 = vsel %vm640, %v971, 0
        %978 = vmatprep.subr.bf16.mxu0 0
        %979 = vmatpush1.bf16.xpose.msra.mxu0 %v976
        %980 = vmatprep.subr.bf16.mxu0 0
        %981 = vmatpush1.bf16.xpose.msra.mxu0 0
        %982 = vmatprep.subr.bf16.mxu0 0
        %983 = vmatpush1.bf16.xpose.msra.mxu0 0
        %984 = vmatprep.subr.bf16.mxu0 0
        %985 = vmatpush1.bf16.xpose.msra.mxu0 0
        %986 = vmatprep.subr.bf16.mxu0 0
        %987 = vmatpush1.bf16.xpose.msra.mxu0 0
        %988 = vmatprep.subr.bf16.mxu0 0
        %989 = vmatpush1.bf16.xpose.msra.mxu0 0
        %990 = vmatprep.subr.bf16.mxu0 0
        %991 = vmatpush1.bf16.xpose.msra.mxu0 0
        %992 = vmatprep.subr.bf16.mxu0 0
        %993 = vmatpush1.bf16.xpose.msra.mxu0 0
        %994 = vmatprep.subr.bf16.mxu0 0
        %995 = vmatpush1.bf16.xpose.msra.mxu0 0
        %996 = vmatprep.subr.bf16.mxu0 0
        %997 = vmatpush1.bf16.xpose.msra.mxu0 0
        %998 = vmatprep.subr.bf16.mxu0 0
        %999 = vmatpush1.bf16.xpose.msra.mxu0 0
        %1000 = vmatprep.subr.bf16.mxu0 0
        %1001 = vmatpush1.bf16.xpose.msra.mxu0 0
        %1002 = vmatprep.subr.bf16.mxu0 0
        %1003 = vmatpush1.bf16.xpose.msra.mxu0 0
        %1004 = vmatprep.subr.bf16.mxu0 0
        %1005 = vmatpush1.bf16.xpose.msra.mxu0 0
        %1006 = vmatprep.subr.bf16.mxu0 0
        %1007 = vmatpush1.bf16.xpose.msra.mxu0 0
        %1008 = vmatprep.subr.bf16.mxu0 0
        %1009 = vmatpush1.bf16.xpose.msra.mxu0 0
        %1010 = vmatprep.mubr.bf16.mxu0 0
        %1011 = vmatmul.mubr.bf16.gmra.mrb[0].mxu0 %v973
        %v1012 = vpop.f32.mrb[0].mxu0
        %v1013 = vadd.f32 %v546, %v1012
        %v1014 = vpop.f32.mrb[0].mxu0
        %v1015 = vpop.f32.mrb[0].mxu0
        %v1016 = vpop.f32.mrb[0].mxu0
        %1017 = vdwg.mxu0
        %v1018 = vsel %vm640, %v1013, -inf
        %1019 = vmax.xlane.f32.xlu0 %v1018
        %v1020 = vpop.xlane.xlu0 %1019
        %v1021 = vsub.f32 %v1013, %v1020
        %v1022 = vmul.f32 %v1021, 1.442695
        %v1023 = vpow.pop %v1022
        %v1024 = vsel %vm640, %v1023, 0.0
        %1025 = vadd.xlane.f32.xlu0 %v1024
        %v1026 = vpop.xlane.xlu0 %1025
        %v1027 = vrcp.pop %v1026
        %v1028 = vmul.f32 %v1023, %v1027
        %v1029 = vpack.c.bf16 %v1028, %v1028
        %1030 = vrot.lane.b32.xlu0 %v636, 40
        %v1031 = vpop.permute.xlu0 %1030
        %v1033 = vsel %vm640, %v1029, 0
        %v1036 = vsel %vm704, %v1031, 0
        %1038 = vmatprep.subr.bf16.mxu0 0
        %1039 = vmatpush1.bf16.msra.mxu0 %v1036
        %1040 = vmatprep.subr.bf16.mxu0 0
        %1041 = vmatpush1.bf16.msra.mxu0 0
        %1042 = vmatprep.subr.bf16.mxu0 0
        %1043 = vmatpush1.bf16.msra.mxu0 0
        %1044 = vmatprep.subr.bf16.mxu0 0
        %1045 = vmatpush1.bf16.msra.mxu0 0
        %1046 = vmatprep.subr.bf16.mxu0 0
        %1047 = vmatpush1.bf16.msra.mxu0 0
        %1048 = vmatprep.subr.bf16.mxu0 0
        %1049 = vmatpush1.bf16.msra.mxu0 0
        %1050 = vmatprep.subr.bf16.mxu0 0
        %1051 = vmatpush1.bf16.msra.mxu0 0
        %1052 = vmatprep.subr.bf16.mxu0 0
        %1053 = vmatpush1.bf16.msra.mxu0 0
        %1054 = vmatprep.subr.bf16.mxu0 0
        %1055 = vmatpush1.bf16.msra.mxu0 0
        %1056 = vmatprep.subr.bf16.mxu0 0
        %1057 = vmatpush1.bf16.msra.mxu0 0
        %1058 = vmatprep.subr.bf16.mxu0 0
        %1059 = vmatpush1.bf16.msra.mxu0 0
        %1060 = vmatprep.subr.bf16.mxu0 0
        %1061 = vmatpush1.bf16.msra.mxu0 0
        %1062 = vmatprep.subr.bf16.mxu0 0
        %1063 = vmatpush1.bf16.msra.mxu0 0
        %1064 = vmatprep.subr.bf16.mxu0 0
        %1065 = vmatpush1.bf16.msra.mxu0 0
        %1066 = vmatprep.subr.bf16.mxu0 0
        %1067 = vmatpush1.bf16.msra.mxu0 0
        %1068 = vmatprep.subr.bf16.mxu0 0
        %1069 = vmatpush1.bf16.msra.mxu0 0
        %1070 = vmatprep.mubr.bf16.mxu0 0
        %1071 = vmatmul.mubr.bf16.gmra.mrb[0].mxu0 %v1033
        %v1072 = vpop.f32.mrb[0].mxu0
        %v1073 = vadd.f32 0.0, %v1072
        %v1074 = vpop.f32.mrb[0].mxu0
        %v1075 = vpop.f32.mrb[0].mxu0
        %v1076 = vpop.f32.mrb[0].mxu0
        %1077 = vdwg.mxu0
        %1079 = vrot.lane.b32.xlu0 %v853, 8
        %v1080 = vpop.permute.xlu0 %1079
        %1083 = vrot.lane.b32.xlu0 %v963, 16
        %v1084 = vpop.permute.xlu0 %1083
        %1087 = vrot.lane.b32.xlu0 %v1073, 24
        %v1088 = vpop.permute.xlu0 %1087
        %v1090 = vsel %vm640, %v743, %v1080
        %vm1091 = vcmask 130048
        %v1092 = vsel %vm1091, %v1090, %v1084
        %vm1093 = vcmask 195584
        %v1094 = vsel %vm1093, %v1092, %v1088
        %v1095 = vpack.c.bf16 %v1094, %v1094
        %v1096 = vld [vmem:[#allocation5] sm:$0xf]
        %v1097 = vld [vmem:[#allocation5 + $0x4] sm:$0xf]
        %v1098 = vld [vmem:[#allocation5 + $0x8] sm:$0xf]
        %v1099 = vld [vmem:[#allocation5 + $0xc] sm:$0xf]
        %v1100 = vlaneseq
        %v1101 = vshrl.u32 %v1100, 7
        %v1102 = vsub.s32 6, %v1101
        %v1103 = vrot.slane %v542, %v1102
        %v1108 = vunpack.c.l.b16 %v1096
        %v1109 = vunpack.c.l.b16 %v1097
        %v1110 = vunpack.c.l.b16 %v1098
        %v1111 = vunpack.c.l.b16 %v1099
        %v1112 = vpack.c.b16 %v1109, %v1108
        %v1113 = vpack.c.b16 %v1111, %v1110
        %v1117 = vsel %vm547, %v1095, 0
        %1119 = vmatprep.subr.bf16.mxu0 0
        %1120 = vmatpush1.bf16.msra.mxu0 %v1112
        %1121 = vmatprep.subr.bf16.mxu0 0
        %1122 = vmatpush1.bf16.msra.mxu0 %v1113
        %1123 = vmatprep.subr.bf16.mxu0 0
        %1124 = vmatpush1.bf16.msra.mxu0 0
        %1125 = vmatprep.subr.bf16.mxu0 0
        %1126 = vmatpush1.bf16.msra.mxu0 0
        %1127 = vmatprep.subr.bf16.mxu0 0
        %1128 = vmatpush1.bf16.msra.mxu0 0
        %1129 = vmatprep.subr.bf16.mxu0 0
        %1130 = vmatpush1.bf16.msra.mxu0 0
        %1131 = vmatprep.subr.bf16.mxu0 0
        %1132 = vmatpush1.bf16.msra.mxu0 0
        %1133 = vmatprep.subr.bf16.mxu0 0
        %1134 = vmatpush1.bf16.msra.mxu0 0
        %1135 = vmatprep.subr.bf16.mxu0 0
        %1136 = vmatpush1.bf16.msra.mxu0 0
        %1137 = vmatprep.subr.bf16.mxu0 0
        %1138 = vmatpush1.bf16.msra.mxu0 0
        %1139 = vmatprep.subr.bf16.mxu0 0
        %1140 = vmatpush1.bf16.msra.mxu0 0
        %1141 = vmatprep.subr.bf16.mxu0 0
        %1142 = vmatpush1.bf16.msra.mxu0 0
        %1143 = vmatprep.subr.bf16.mxu0 0
        %1144 = vmatpush1.bf16.msra.mxu0 0
        %1145 = vmatprep.subr.bf16.mxu0 0
        %1146 = vmatpush1.bf16.msra.mxu0 0
        %1147 = vmatprep.subr.bf16.mxu0 0
        %1148 = vmatpush1.bf16.msra.mxu0 0
        %1149 = vmatprep.subr.bf16.mxu0 0
        %1150 = vmatpush1.bf16.msra.mxu0 0
        %1151 = vmatprep.mubr.bf16.mxu0 0
        %1152 = vmatmul.mubr.bf16.gmra.mrb[0].mxu0 %v1117
        %v1153 = vpop.f32.mrb[0].mxu0
        %v1154 = vadd.f32 %v1103, %v1153
        %v1155 = vpop.f32.mrb[0].mxu0
        %v1156 = vpop.f32.mrb[0].mxu0
        %v1157 = vpop.f32.mrb[0].mxu0
        %1158 = vdwg.mxu0
        %v1159 = vadd.f32 %v571, %v1154
        %v1160 = vsel %vm547, %v1159, 0.0
        %1161 = vadd.xlane.f32.xlu0 %v1160
        %v1162 = vpop.xlane.xlu0 %1161
        %v1163 = vmul.f32 %v1162, %v551
        %v1164 = vsub.f32 %v1159, %v1163
        %v1165 = vmul.f32 %v1164, %v1164
        %v1166 = vsel %vm547, %v1165, 0.0
        %1167 = vadd.xlane.f32.xlu0 %v1166
        %v1168 = vpop.xlane.xlu0 %1167
        %v1169 = vmul.f32 %v1168, %v551
        %v1170 = vadd.f32 %v1169, 1e-05
        %v1171 = vrsqrt.pop %v1170
        %v1172 = vmul.f32 %v1164, %v1171
        %v1173 = vlaneseq
        %v1174 = vshrl.u32 %v1173, 7
        %v1175 = vsub.s32 2, %v1174
        %v1176 = vrot.slane %v542, %v1175
        %v1177 = vmul.f32 %v1172, %v1176
        %v1178 = vlaneseq
        %v1179 = vshrl.u32 %v1178, 7
        %v1180 = vsub.s32 3, %v1179
        %v1181 = vrot.slane %v542, %v1180
        %v1182 = vadd.f32 %v1177, %v1181
        %v1183 = vpack.c.bf16 %v1182, %v1182
        %v1184 = vld [vmem:[#allocation7] sm:$0xf]
        %v1185 = vld [vmem:[#allocation7 + $0x4] sm:$0xf]
        %v1186 = vld [vmem:[#allocation7 + $0x8] sm:$0xf]
        %v1187 = vld [vmem:[#allocation7 + $0xc] sm:$0xf]
        %v1188 = vlaneseq
        %v1189 = vshrl.u32 %v1188, 7
        %v1190 = vsub.s32 1, %v1189
        %v1191 = vrot.slane %v545, %v1190
        %v1196 = vunpack.c.l.b16 %v1184
        %v1197 = vunpack.c.l.b16 %v1185
        %v1198 = vunpack.c.l.b16 %v1186
        %v1199 = vunpack.c.l.b16 %v1187
        %v1200 = vpack.c.b16 %v1197, %v1196
        %v1201 = vpack.c.b16 %v1199, %v1198
        %v1205 = vsel %vm547, %v1183, 0
        %1207 = vmatprep.subr.bf16.mxu0 0
        %1208 = vmatpush1.bf16.msra.mxu0 %v1200
        %1209 = vmatprep.subr.bf16.mxu0 0
        %1210 = vmatpush1.bf16.msra.mxu0 %v1201
        %1211 = vmatprep.subr.bf16.mxu0 0
        %1212 = vmatpush1.bf16.msra.mxu0 0
        %1213 = vmatprep.subr.bf16.mxu0 0
        %1214 = vmatpush1.bf16.msra.mxu0 0
        %1215 = vmatprep.subr.bf16.mxu0 0
        %1216 = vmatpush1.bf16.msra.mxu0 0
        %1217 = vmatprep.subr.bf16.mxu0 0
        %1218 = vmatpush1.bf16.msra.mxu0 0
        %1219 = vmatprep.subr.bf16.mxu0 0
        %1220 = vmatpush1.bf16.msra.mxu0 0
        %1221 = vmatprep.subr.bf16.mxu0 0
        %1222 = vmatpush1.bf16.msra.mxu0 0
        %1223 = vmatprep.subr.bf16.mxu0 0
        %1224 = vmatpush1.bf16.msra.mxu0 0
        %1225 = vmatprep.subr.bf16.mxu0 0
        %1226 = vmatpush1.bf16.msra.mxu0 0
        %1227 = vmatprep.subr.bf16.mxu0 0
        %1228 = vmatpush1.bf16.msra.mxu0 0
        %1229 = vmatprep.subr.bf16.mxu0 0
        %1230 = vmatpush1.bf16.msra.mxu0 0
        %1231 = vmatprep.subr.bf16.mxu0 0
        %1232 = vmatpush1.bf16.msra.mxu0 0
        %1233 = vmatprep.subr.bf16.mxu0 0
        %1234 = vmatpush1.bf16.msra.mxu0 0
        %1235 = vmatprep.subr.bf16.mxu0 0
        %1236 = vmatpush1.bf16.msra.mxu0 0
        %1237 = vmatprep.subr.bf16.mxu0 0
        %1238 = vmatpush1.bf16.msra.mxu0 0
        %1239 = vmatprep.mubr.bf16.mxu0 0
        %1240 = vmatmul.mubr.bf16.gmra.mrb[0].mxu0 %v1205
        %v1241 = vpop.f32.mrb[0].mxu0
        %v1242 = vadd.f32 %v1191, %v1241
        %v1243 = vpop.f32.mrb[0].mxu0
        %v1244 = vpop.f32.mrb[0].mxu0
        %v1245 = vpop.f32.mrb[0].mxu0
        %1246 = vdwg.mxu0
        %v1247 = vpack.c.bf16 %v541, %v541
        %v1248 = vld [vmem:[#allocation8] sm:$0xf]
        %v1249 = vld [vmem:[#allocation8 + $0x4] sm:$0xf]
        %v1250 = vld [vmem:[#allocation8 + $0x8] sm:$0xf]
        %v1251 = vld [vmem:[#allocation8 + $0xc] sm:$0xf]
        %v1252 = vlaneseq
        %v1253 = vshrl.u32 %v1252, 7
        %v1254 = vsub.s32 2, %v1253
        %v1255 = vrot.slane %v545, %v1254
        %v1260 = vunpack.c.l.b16 %v1248
        %v1261 = vunpack.c.l.b16 %v1249
        %v1262 = vunpack.c.l.b16 %v1250
        %v1263 = vunpack.c.l.b16 %v1251
        %v1264 = vpack.c.b16 %v1261, %v1260
        %v1265 = vpack.c.b16 %v1263, %v1262
        %v1269 = vsel %vm547, %v1247, 0
        %1271 = vmatprep.subr.bf16.mxu0 0
        %1272 = vmatpush1.bf16.msra.mxu0 %v1264
        %1273 = vmatprep.subr.bf16.mxu0 0
        %1274 = vmatpush1.bf16.msra.mxu0 %v1265
        %1275 = vmatprep.subr.bf16.mxu0 0
        %1276 = vmatpush1.bf16.msra.mxu0 0
        %1277 = vmatprep.subr.bf16.mxu0 0
        %1278 = vmatpush1.bf16.msra.mxu0 0
        %1279 = vmatprep.subr.bf16.mxu0 0
        %1280 = vmatpush1.bf16.msra.mxu0 0
        %1281 = vmatprep.subr.bf16.mxu0 0
        %1282 = vmatpush1.bf16.msra.mxu0 0
        %1283 = vmatprep.subr.bf16.mxu0 0
        %1284 = vmatpush1.bf16.msra.mxu0 0
        %1285 = vmatprep.subr.bf16.mxu0 0
        %1286 = vmatpush1.bf16.msra.mxu0 0
        %1287 = vmatprep.subr.bf16.mxu0 0
        %1288 = vmatpush1.bf16.msra.mxu0 0
        %1289 = vmatprep.subr.bf16.mxu0 0
        %1290 = vmatpush1.bf16.msra.mxu0 0
        %1291 = vmatprep.subr.bf16.mxu0 0
        %1292 = vmatpush1.bf16.msra.mxu0 0
        %1293 = vmatprep.subr.bf16.mxu0 0
        %1294 = vmatpush1.bf16.msra.mxu0 0
        %1295 = vmatprep.subr.bf16.mxu0 0
        %1296 = vmatpush1.bf16.msra.mxu0 0
        %1297 = vmatprep.subr.bf16.mxu0 0
        %1298 = vmatpush1.bf16.msra.mxu0 0
        %1299 = vmatprep.subr.bf16.mxu0 0
        %1300 = vmatpush1.bf16.msra.mxu0 0
        %1301 = vmatprep.subr.bf16.mxu0 0
        %1302 = vmatpush1.bf16.msra.mxu0 0
        %1303 = vmatprep.mubr.bf16.mxu0 0
        %1304 = vmatmul.mubr.bf16.gmra.mrb[0].mxu0 %v1269
        %v1305 = vpop.f32.mrb[0].mxu0
        %v1306 = vadd.f32 %v1255, %v1305
        %v1307 = vpop.f32.mrb[0].mxu0
        %v1308 = vpop.f32.mrb[0].mxu0
        %v1309 = vpop.f32.mrb[0].mxu0
        %1310 = vdwg.mxu0
        %v1311 = vpack.c.bf16 %v1242, %v1242
        %v1312 = vpack.c.bf16 %v1306, %v1306
        %v1314 = vsel %vm640, %v1311, 0
        %v1317 = vsel %vm640, %v1312, 0
        %1319 = vmatprep.subr.bf16.mxu0 0
        %1320 = vmatpush1.bf16.xpose.msra.mxu0 %v1317
        %1321 = vmatprep.subr.bf16.mxu0 0
        %1322 = vmatpush1.bf16.xpose.msra.mxu0 0
        %1323 = vmatprep.subr.bf16.mxu0 0
        %1324 = vmatpush1.bf16.xpose.msra.mxu0 0
        %1325 = vmatprep.subr.bf16.mxu0 0
        %1326 = vmatpush1.bf16.xpose.msra.mxu0 0
        %1327 = vmatprep.subr.bf16.mxu0 0
        %1328 = vmatpush1.bf16.xpose.msra.mxu0 0
        %1329 = vmatprep.subr.bf16.mxu0 0
        %1330 = vmatpush1.bf16.xpose.msra.mxu0 0
        %1331 = vmatprep.subr.bf16.mxu0 0
        %1332 = vmatpush1.bf16.xpose.msra.mxu0 0
        %1333 = vmatprep.subr.bf16.mxu0 0
        %1334 = vmatpush1.bf16.xpose.msra.mxu0 0
        %1335 = vmatprep.subr.bf16.mxu0 0
        %1336 = vmatpush1.bf16.xpose.msra.mxu0 0
        %1337 = vmatprep.subr.bf16.mxu0 0
        %1338 = vmatpush1.bf16.xpose.msra.mxu0 0
        %1339 = vmatprep.subr.bf16.mxu0 0
        %1340 = vmatpush1.bf16.xpose.msra.mxu0 0
        %1341 = vmatprep.subr.bf16.mxu0 0
        %1342 = vmatpush1.bf16.xpose.msra.mxu0 0
        %1343 = vmatprep.subr.bf16.mxu0 0
        %1344 = vmatpush1.bf16.xpose.msra.mxu0 0
        %1345 = vmatprep.subr.bf16.mxu0 0
        %1346 = vmatpush1.bf16.xpose.msra.mxu0 0
        %1347 = vmatprep.subr.bf16.mxu0 0
        %1348 = vmatpush1.bf16.xpose.msra.mxu0 0
        %1349 = vmatprep.subr.bf16.mxu0 0
        %1350 = vmatpush1.bf16.xpose.msra.mxu0 0
        %1351 = vmatprep.mubr.bf16.mxu0 0
        %1352 = vmatmul.mubr.bf16.gmra.mrb[0].mxu0 %v1314
        %v1353 = vpop.f32.mrb[0].mxu0
        %v1354 = vadd.f32 %v546, %v1353
        %v1355 = vpop.f32.mrb[0].mxu0
        %v1356 = vpop.f32.mrb[0].mxu0
        %v1357 = vpop.f32.mrb[0].mxu0
        %1358 = vdwg.mxu0
        %v1359 = vsel %vm640, %v1354, -inf
        %1360 = vmax.xlane.f32.xlu0 %v1359
        %v1361 = vpop.xlane.xlu0 %1360
        %v1362 = vsub.f32 %v1354, %v1361
        %v1363 = vmul.f32 %v1362, 1.442695
        %v1364 = vpow.pop %v1363
        %v1365 = vsel %vm640, %v1364, 0.0
        %1366 = vadd.xlane.f32.xlu0 %v1365
        %v1367 = vpop.xlane.xlu0 %1366
        %v1368 = vrcp.pop %v1367
        %v1369 = vmul.f32 %v1364, %v1368
        %v1370 = vpack.c.bf16 %v1369, %v1369
        %1372 = vrot.lane.b32.xlu0 %v1312, 96
        %v1373 = vpop.permute.xlu0 %1372
        %v1375 = vsel %vm640, %v1370, 0
        %v1378 = vsel %vm704, %v1373, 0
        %1380 = vmatprep.subr.bf16.mxu0 0
        %1381 = vmatpush1.bf16.msra.mxu0 %v1378
        %1382 = vmatprep.subr.bf16.mxu0 0
        %1383 = vmatpush1.bf16.msra.mxu0 0
        %1384 = vmatprep.subr.bf16.mxu0 0
        %1385 = vmatpush1.bf16.msra.mxu0 0
        %1386 = vmatprep.subr.bf16.mxu0 0
        %1387 = vmatpush1.bf16.msra.mxu0 0
        %1388 = vmatprep.subr.bf16.mxu0 0
        %1389 = vmatpush1.bf16.msra.mxu0 0
        %1390 = vmatprep.subr.bf16.mxu0 0
        %1391 = vmatpush1.bf16.msra.mxu0 0
        %1392 = vmatprep.subr.bf16.mxu0 0
        %1393 = vmatpush1.bf16.msra.mxu0 0
        %1394 = vmatprep.subr.bf16.mxu0 0
        %1395 = vmatpush1.bf16.msra.mxu0 0
        %1396 = vmatprep.subr.bf16.mxu0 0
        %1397 = vmatpush1.bf16.msra.mxu0 0
        %1398 = vmatprep.subr.bf16.mxu0 0
        %1399 = vmatpush1.bf16.msra.mxu0 0
        %1400 = vmatprep.subr.bf16.mxu0 0
        %1401 = vmatpush1.bf16.msra.mxu0 0
        %1402 = vmatprep.subr.bf16.mxu0 0
        %1403 = vmatpush1.bf16.msra.mxu0 0
        %1404 = vmatprep.subr.bf16.mxu0 0
        %1405 = vmatpush1.bf16.msra.mxu0 0
        %1406 = vmatprep.subr.bf16.mxu0 0
        %1407 = vmatpush1.bf16.msra.mxu0 0
        %1408 = vmatprep.subr.bf16.mxu0 0
        %1409 = vmatpush1.bf16.msra.mxu0 0
        %1410 = vmatprep.subr.bf16.mxu0 0
        %1411 = vmatpush1.bf16.msra.mxu0 0
        %1412 = vmatprep.mubr.bf16.mxu0 0
        %1413 = vmatmul.mubr.bf16.gmra.mrb[0].mxu0 %v1375
        %v1414 = vpop.f32.mrb[0].mxu0
        %v1415 = vadd.f32 0.0, %v1414
        %v1416 = vpop.f32.mrb[0].mxu0
        %v1417 = vpop.f32.mrb[0].mxu0
        %v1418 = vpop.f32.mrb[0].mxu0
        %1419 = vdwg.mxu0
        %1421 = vrot.lane.b32.xlu0 %v1311, 120
        %v1422 = vpop.permute.xlu0 %1421
        %1423 = vrot.lane.b32.xlu0 %v1312, 120
        %v1424 = vpop.permute.xlu0 %1423
        %v1426 = vsel %vm640, %v1422, 0
        %v1429 = vsel %vm640, %v1424, 0
        %1431 = vmatprep.subr.bf16.mxu0 0
        %1432 = vmatpush1.bf16.xpose.msra.mxu0 %v1429
        %1433 = vmatprep.subr.bf16.mxu0 0
        %1434 = vmatpush1.bf16.xpose.msra.mxu0 0
        %1435 = vmatprep.subr.bf16.mxu0 0
        %1436 = vmatpush1.bf16.xpose.msra.mxu0 0
        %1437 = vmatprep.subr.bf16.mxu0 0
        %1438 = vmatpush1.bf16.xpose.msra.mxu0 0
        %1439 = vmatprep.subr.bf16.mxu0 0
        %1440 = vmatpush1.bf16.xpose.msra.mxu0 0
        %1441 = vmatprep.subr.bf16.mxu0 0
        %1442 = vmatpush1.bf16.xpose.msra.mxu0 0
        %1443 = vmatprep.subr.bf16.mxu0 0
        %1444 = vmatpush1.bf16.xpose.msra.mxu0 0
        %1445 = vmatprep.subr.bf16.mxu0 0
        %1446 = vmatpush1.bf16.xpose.msra.mxu0 0
        %1447 = vmatprep.subr.bf16.mxu0 0
        %1448 = vmatpush1.bf16.xpose.msra.mxu0 0
        %1449 = vmatprep.subr.bf16.mxu0 0
        %1450 = vmatpush1.bf16.xpose.msra.mxu0 0
        %1451 = vmatprep.subr.bf16.mxu0 0
        %1452 = vmatpush1.bf16.xpose.msra.mxu0 0
        %1453 = vmatprep.subr.bf16.mxu0 0
        %1454 = vmatpush1.bf16.xpose.msra.mxu0 0
        %1455 = vmatprep.subr.bf16.mxu0 0
        %1456 = vmatpush1.bf16.xpose.msra.mxu0 0
        %1457 = vmatprep.subr.bf16.mxu0 0
        %1458 = vmatpush1.bf16.xpose.msra.mxu0 0
        %1459 = vmatprep.subr.bf16.mxu0 0
        %1460 = vmatpush1.bf16.xpose.msra.mxu0 0
        %1461 = vmatprep.subr.bf16.mxu0 0
        %1462 = vmatpush1.bf16.xpose.msra.mxu0 0
        %1463 = vmatprep.mubr.bf16.mxu0 0
        %1464 = vmatmul.mubr.bf16.gmra.mrb[0].mxu0 %v1426
        %v1465 = vpop.f32.mrb[0].mxu0
        %v1466 = vadd.f32 %v546, %v1465
        %v1467 = vpop.f32.mrb[0].mxu0
        %v1468 = vpop.f32.mrb[0].mxu0
        %v1469 = vpop.f32.mrb[0].mxu0
        %1470 = vdwg.mxu0
        %v1471 = vsel %vm640, %v1466, -inf
        %1472 = vmax.xlane.f32.xlu0 %v1471
        %v1473 = vpop.xlane.xlu0 %1472
        %v1474 = vsub.f32 %v1466, %v1473
        %v1475 = vmul.f32 %v1474, 1.442695
        %v1476 = vpow.pop %v1475
        %v1477 = vsel %vm640, %v1476, 0.0
        %1478 = vadd.xlane.f32.xlu0 %v1477
        %v1479 = vpop.xlane.xlu0 %1478
        %v1480 = vrcp.pop %v1479
        %v1481 = vmul.f32 %v1476, %v1480
        %v1482 = vpack.c.bf16 %v1481, %v1481
        %1483 = vrot.lane.b32.xlu0 %v1312, 88
        %v1484 = vpop.permute.xlu0 %1483
        %v1486 = vsel %vm640, %v1482, 0
        %v1489 = vsel %vm704, %v1484, 0
        %1491 = vmatprep.subr.bf16.mxu0 0
        %1492 = vmatpush1.bf16.msra.mxu0 %v1489
        %1493 = vmatprep.subr.bf16.mxu0 0
        %1494 = vmatpush1.bf16.msra.mxu0 0
        %1495 = vmatprep.subr.bf16.mxu0 0
        %1496 = vmatpush1.bf16.msra.mxu0 0
        %1497 = vmatprep.subr.bf16.mxu0 0
        %1498 = vmatpush1.bf16.msra.mxu0 0
        %1499 = vmatprep.subr.bf16.mxu0 0
        %1500 = vmatpush1.bf16.msra.mxu0 0
        %1501 = vmatprep.subr.bf16.mxu0 0
        %1502 = vmatpush1.bf16.msra.mxu0 0
        %1503 = vmatprep.subr.bf16.mxu0 0
        %1504 = vmatpush1.bf16.msra.mxu0 0
        %1505 = vmatprep.subr.bf16.mxu0 0
        %1506 = vmatpush1.bf16.msra.mxu0 0
        %1507 = vmatprep.subr.bf16.mxu0 0
        %1508 = vmatpush1.bf16.msra.mxu0 0
        %1509 = vmatprep.subr.bf16.mxu0 0
        %1510 = vmatpush1.bf16.msra.mxu0 0
        %1511 = vmatprep.subr.bf16.mxu0 0
        %1512 = vmatpush1.bf16.msra.mxu0 0
        %1513 = vmatprep.subr.bf16.mxu0 0
        %1514 = vmatpush1.bf16.msra.mxu0 0
        %1515 = vmatprep.subr.bf16.mxu0 0
        %1516 = vmatpush1.bf16.msra.mxu0 0
        %1517 = vmatprep.subr.bf16.mxu0 0
        %1518 = vmatpush1.bf16.msra.mxu0 0
        %1519 = vmatprep.subr.bf16.mxu0 0
        %1520 = vmatpush1.bf16.msra.mxu0 0
        %1521 = vmatprep.subr.bf16.mxu0 0
        %1522 = vmatpush1.bf16.msra.mxu0 0
        %1523 = vmatprep.mubr.bf16.mxu0 0
        %1524 = vmatmul.mubr.bf16.gmra.mrb[0].mxu0 %v1486
        %v1525 = vpop.f32.mrb[0].mxu0
        %v1526 = vadd.f32 0.0, %v1525
        %v1527 = vpop.f32.mrb[0].mxu0
        %v1528 = vpop.f32.mrb[0].mxu0
        %v1529 = vpop.f32.mrb[0].mxu0
        %1530 = vdwg.mxu0
        %1531 = vrot.lane.b32.xlu0 %v1311, 112
        %v1532 = vpop.permute.xlu0 %1531
        %1533 = vrot.lane.b32.xlu0 %v1312, 112
        %v1534 = vpop.permute.xlu0 %1533
        %v1536 = vsel %vm640, %v1532, 0
        %v1539 = vsel %vm640, %v1534, 0
        %1541 = vmatprep.subr.bf16.mxu0 0
        %1542 = vmatpush1.bf16.xpose.msra.mxu0 %v1539
        %1543 = vmatprep.subr.bf16.mxu0 0
        %1544 = vmatpush1.bf16.xpose.msra.mxu0 0
        %1545 = vmatprep.subr.bf16.mxu0 0
        %1546 = vmatpush1.bf16.xpose.msra.mxu0 0
        %1547 = vmatprep.subr.bf16.mxu0 0
        %1548 = vmatpush1.bf16.xpose.msra.mxu0 0
        %1549 = vmatprep.subr.bf16.mxu0 0
        %1550 = vmatpush1.bf16.xpose.msra.mxu0 0
        %1551 = vmatprep.subr.bf16.mxu0 0
        %1552 = vmatpush1.bf16.xpose.msra.mxu0 0
        %1553 = vmatprep.subr.bf16.mxu0 0
        %1554 = vmatpush1.bf16.xpose.msra.mxu0 0
        %1555 = vmatprep.subr.bf16.mxu0 0
        %1556 = vmatpush1.bf16.xpose.msra.mxu0 0
        %1557 = vmatprep.subr.bf16.mxu0 0
        %1558 = vmatpush1.bf16.xpose.msra.mxu0 0
        %1559 = vmatprep.subr.bf16.mxu0 0
        %1560 = vmatpush1.bf16.xpose.msra.mxu0 0
        %1561 = vmatprep.subr.bf16.mxu0 0
        %1562 = vmatpush1.bf16.xpose.msra.mxu0 0
        %1563 = vmatprep.subr.bf16.mxu0 0
        %1564 = vmatpush1.bf16.xpose.msra.mxu0 0
        %1565 = vmatprep.subr.bf16.mxu0 0
        %1566 = vmatpush1.bf16.xpose.msra.mxu0 0
        %1567 = vmatprep.subr.bf16.mxu0 0
        %1568 = vmatpush1.bf16.xpose.msra.mxu0 0
        %1569 = vmatprep.subr.bf16.mxu0 0
        %1570 = vmatpush1.bf16.xpose.msra.mxu0 0
        %1571 = vmatprep.subr.bf16.mxu0 0
        %1572 = vmatpush1.bf16.xpose.msra.mxu0 0
        %1573 = vmatprep.mubr.bf16.mxu0 0
        %1574 = vmatmul.mubr.bf16.gmra.mrb[0].mxu0 %v1536
        %v1575 = vpop.f32.mrb[0].mxu0
        %v1576 = vadd.f32 %v546, %v1575
        %v1577 = vpop.f32.mrb[0].mxu0
        %v1578 = vpop.f32.mrb[0].mxu0
        %v1579 = vpop.f32.mrb[0].mxu0
        %1580 = vdwg.mxu0
        %v1581 = vsel %vm640, %v1576, -inf
        %1582 = vmax.xlane.f32.xlu0 %v1581
        %v1583 = vpop.xlane.xlu0 %1582
        %v1584 = vsub.f32 %v1576, %v1583
        %v1585 = vmul.f32 %v1584, 1.442695
        %v1586 = vpow.pop %v1585
        %v1587 = vsel %vm640, %v1586, 0.0
        %1588 = vadd.xlane.f32.xlu0 %v1587
        %v1589 = vpop.xlane.xlu0 %1588
        %v1590 = vrcp.pop %v1589
        %v1591 = vmul.f32 %v1586, %v1590
        %v1592 = vpack.c.bf16 %v1591, %v1591
        %1593 = vrot.lane.b32.xlu0 %v1312, 80
        %v1594 = vpop.permute.xlu0 %1593
        %v1596 = vsel %vm640, %v1592, 0
        %v1599 = vsel %vm704, %v1594, 0
        %1601 = vmatprep.subr.bf16.mxu0 0
        %1602 = vmatpush1.bf16.msra.mxu0 %v1599
        %1603 = vmatprep.subr.bf16.mxu0 0
        %1604 = vmatpush1.bf16.msra.mxu0 0
        %1605 = vmatprep.subr.bf16.mxu0 0
        %1606 = vmatpush1.bf16.msra.mxu0 0
        %1607 = vmatprep.subr.bf16.mxu0 0
        %1608 = vmatpush1.bf16.msra.mxu0 0
        %1609 = vmatprep.subr.bf16.mxu0 0
        %1610 = vmatpush1.bf16.msra.mxu0 0
        %1611 = vmatprep.subr.bf16.mxu0 0
        %1612 = vmatpush1.bf16.msra.mxu0 0
        %1613 = vmatprep.subr.bf16.mxu0 0
        %1614 = vmatpush1.bf16.msra.mxu0 0
        %1615 = vmatprep.subr.bf16.mxu0 0
        %1616 = vmatpush1.bf16.msra.mxu0 0
        %1617 = vmatprep.subr.bf16.mxu0 0
        %1618 = vmatpush1.bf16.msra.mxu0 0
        %1619 = vmatprep.subr.bf16.mxu0 0
        %1620 = vmatpush1.bf16.msra.mxu0 0
        %1621 = vmatprep.subr.bf16.mxu0 0
        %1622 = vmatpush1.bf16.msra.mxu0 0
        %1623 = vmatprep.subr.bf16.mxu0 0
        %1624 = vmatpush1.bf16.msra.mxu0 0
        %1625 = vmatprep.subr.bf16.mxu0 0
        %1626 = vmatpush1.bf16.msra.mxu0 0
        %1627 = vmatprep.subr.bf16.mxu0 0
        %1628 = vmatpush1.bf16.msra.mxu0 0
        %1629 = vmatprep.subr.bf16.mxu0 0
        %1630 = vmatpush1.bf16.msra.mxu0 0
        %1631 = vmatprep.subr.bf16.mxu0 0
        %1632 = vmatpush1.bf16.msra.mxu0 0
        %1633 = vmatprep.mubr.bf16.mxu0 0
        %1634 = vmatmul.mubr.bf16.gmra.mrb[0].mxu0 %v1596
        %v1635 = vpop.f32.mrb[0].mxu0
        %v1636 = vadd.f32 0.0, %v1635
        %v1637 = vpop.f32.mrb[0].mxu0
        %v1638 = vpop.f32.mrb[0].mxu0
        %v1639 = vpop.f32.mrb[0].mxu0
        %1640 = vdwg.mxu0
        %1641 = vrot.lane.b32.xlu0 %v1311, 104
        %v1642 = vpop.permute.xlu0 %1641
        %1643 = vrot.lane.b32.xlu0 %v1312, 104
        %v1644 = vpop.permute.xlu0 %1643
        %v1646 = vsel %vm640, %v1642, 0
        %v1649 = vsel %vm640, %v1644, 0
        %1651 = vmatprep.subr.bf16.mxu0 0
        %1652 = vmatpush1.bf16.xpose.msra.mxu0 %v1649
        %1653 = vmatprep.subr.bf16.mxu0 0
        %1654 = vmatpush1.bf16.xpose.msra.mxu0 0
        %1655 = vmatprep.subr.bf16.mxu0 0
        %1656 = vmatpush1.bf16.xpose.msra.mxu0 0
        %1657 = vmatprep.subr.bf16.mxu0 0
        %1658 = vmatpush1.bf16.xpose.msra.mxu0 0
        %1659 = vmatprep.subr.bf16.mxu0 0
        %1660 = vmatpush1.bf16.xpose.msra.mxu0 0
        %1661 = vmatprep.subr.bf16.mxu0 0
        %1662 = vmatpush1.bf16.xpose.msra.mxu0 0
        %1663 = vmatprep.subr.bf16.mxu0 0
        %1664 = vmatpush1.bf16.xpose.msra.mxu0 0
        %1665 = vmatprep.subr.bf16.mxu0 0
        %1666 = vmatpush1.bf16.xpose.msra.mxu0 0
        %1667 = vmatprep.subr.bf16.mxu0 0
        %1668 = vmatpush1.bf16.xpose.msra.mxu0 0
        %1669 = vmatprep.subr.bf16.mxu0 0
        %1670 = vmatpush1.bf16.xpose.msra.mxu0 0
        %1671 = vmatprep.subr.bf16.mxu0 0
        %1672 = vmatpush1.bf16.xpose.msra.mxu0 0
        %1673 = vmatprep.subr.bf16.mxu0 0
        %1674 = vmatpush1.bf16.xpose.msra.mxu0 0
        %1675 = vmatprep.subr.bf16.mxu0 0
        %1676 = vmatpush1.bf16.xpose.msra.mxu0 0
        %1677 = vmatprep.subr.bf16.mxu0 0
        %1678 = vmatpush1.bf16.xpose.msra.mxu0 0
        %1679 = vmatprep.subr.bf16.mxu0 0
        %1680 = vmatpush1.bf16.xpose.msra.mxu0 0
        %1681 = vmatprep.subr.bf16.mxu0 0
        %1682 = vmatpush1.bf16.xpose.msra.mxu0 0
        %1683 = vmatprep.mubr.bf16.mxu0 0
        %1684 = vmatmul.mubr.bf16.gmra.mrb[0].mxu0 %v1646
        %v1685 = vpop.f32.mrb[0].mxu0
        %v1686 = vadd.f32 %v546, %v1685
        %v1687 = vpop.f32.mrb[0].mxu0
        %v1688 = vpop.f32.mrb[0].mxu0
        %v1689 = vpop.f32.mrb[0].mxu0
        %1690 = vdwg.mxu0
        %v1691 = vsel %vm640, %v1686, -inf
        %1692 = vmax.xlane.f32.xlu0 %v1691
        %v1693 = vpop.xlane.xlu0 %1692
        %v1694 = vsub.f32 %v1686, %v1693
        %v1695 = vmul.f32 %v1694, 1.442695
        %v1696 = vpow.pop %v1695
        %v1697 = vsel %vm640, %v1696, 0.0
        %1698 = vadd.xlane.f32.xlu0 %v1697
        %v1699 = vpop.xlane.xlu0 %1698
        %v1700 = vrcp.pop %v1699
        %v1701 = vmul.f32 %v1696, %v1700
        %v1702 = vpack.c.bf16 %v1701, %v1701
        %1703 = vrot.lane.b32.xlu0 %v1312, 72
        %v1704 = vpop.permute.xlu0 %1703
        %v1706 = vsel %vm640, %v1702, 0
        %v1709 = vsel %vm704, %v1704, 0
        %1711 = vmatprep.subr.bf16.mxu0 0
        %1712 = vmatpush1.bf16.msra.mxu0 %v1709
        %1713 = vmatprep.subr.bf16.mxu0 0
        %1714 = vmatpush1.bf16.msra.mxu0 0
        %1715 = vmatprep.subr.bf16.mxu0 0
        %1716 = vmatpush1.bf16.msra.mxu0 0
        %1717 = vmatprep.subr.bf16.mxu0 0
        %1718 = vmatpush1.bf16.msra.mxu0 0
        %1719 = vmatprep.subr.bf16.mxu0 0
        %1720 = vmatpush1.bf16.msra.mxu0 0
        %1721 = vmatprep.subr.bf16.mxu0 0
        %1722 = vmatpush1.bf16.msra.mxu0 0
        %1723 = vmatprep.subr.bf16.mxu0 0
        %1724 = vmatpush1.bf16.msra.mxu0 0
        %1725 = vmatprep.subr.bf16.mxu0 0
        %1726 = vmatpush1.bf16.msra.mxu0 0
        %1727 = vmatprep.subr.bf16.mxu0 0
        %1728 = vmatpush1.bf16.msra.mxu0 0
        %1729 = vmatprep.subr.bf16.mxu0 0
        %1730 = vmatpush1.bf16.msra.mxu0 0
        %1731 = vmatprep.subr.bf16.mxu0 0
        %1732 = vmatpush1.bf16.msra.mxu0 0
        %1733 = vmatprep.subr.bf16.mxu0 0
        %1734 = vmatpush1.bf16.msra.mxu0 0
        %1735 = vmatprep.subr.bf16.mxu0 0
        %1736 = vmatpush1.bf16.msra.mxu0 0
        %1737 = vmatprep.subr.bf16.mxu0 0
        %1738 = vmatpush1.bf16.msra.mxu0 0
        %1739 = vmatprep.subr.bf16.mxu0 0
        %1740 = vmatpush1.bf16.msra.mxu0 0
        %1741 = vmatprep.subr.bf16.mxu0 0
        %1742 = vmatpush1.bf16.msra.mxu0 0
        %1743 = vmatprep.mubr.bf16.mxu0 0
        %1744 = vmatmul.mubr.bf16.gmra.mrb[0].mxu0 %v1706
        %v1745 = vpop.f32.mrb[0].mxu0
        %v1746 = vadd.f32 0.0, %v1745
        %v1747 = vpop.f32.mrb[0].mxu0
        %v1748 = vpop.f32.mrb[0].mxu0
        %v1749 = vpop.f32.mrb[0].mxu0
        %1750 = vdwg.mxu0
        %1752 = vrot.lane.b32.xlu0 %v1526, 8
        %v1753 = vpop.permute.xlu0 %1752
        %1756 = vrot.lane.b32.xlu0 %v1636, 16
        %v1757 = vpop.permute.xlu0 %1756
        %1760 = vrot.lane.b32.xlu0 %v1746, 24
        %v1761 = vpop.permute.xlu0 %1760
        %v1763 = vsel %vm640, %v1415, %v1753
        %v1764 = vsel %vm1091, %v1763, %v1757
        %v1765 = vsel %vm1093, %v1764, %v1761
        %v1766 = vpack.c.bf16 %v1765, %v1765
        %v1767 = vld [vmem:[#allocation10] sm:$0xf]
        %v1768 = vld [vmem:[#allocation10 + $0x4] sm:$0xf]
        %v1769 = vld [vmem:[#allocation10 + $0x8] sm:$0xf]
        %v1770 = vld [vmem:[#allocation10 + $0xc] sm:$0xf]
        %v1771 = vlaneseq
        %v1772 = vshrl.u32 %v1771, 7
        %v1773 = vsub.s32 7, %v1772
        %v1774 = vrot.slane %v542, %v1773
        %v1779 = vunpack.c.l.b16 %v1767
        %v1780 = vunpack.c.l.b16 %v1768
        %v1781 = vunpack.c.l.b16 %v1769
        %v1782 = vunpack.c.l.b16 %v1770
        %v1783 = vpack.c.b16 %v1780, %v1779
        %v1784 = vpack.c.b16 %v1782, %v1781
        %v1788 = vsel %vm547, %v1766, 0
        %1790 = vmatprep.subr.bf16.mxu0 0
        %1791 = vmatpush1.bf16.msra.mxu0 %v1783
        %1792 = vmatprep.subr.bf16.mxu0 0
        %1793 = vmatpush1.bf16.msra.mxu0 %v1784
        %1794 = vmatprep.subr.bf16.mxu0 0
        %1795 = vmatpush1.bf16.msra.mxu0 0
        %1796 = vmatprep.subr.bf16.mxu0 0
        %1797 = vmatpush1.bf16.msra.mxu0 0
        %1798 = vmatprep.subr.bf16.mxu0 0
        %1799 = vmatpush1.bf16.msra.mxu0 0
        %1800 = vmatprep.subr.bf16.mxu0 0
        %1801 = vmatpush1.bf16.msra.mxu0 0
        %1802 = vmatprep.subr.bf16.mxu0 0
        %1803 = vmatpush1.bf16.msra.mxu0 0
        %1804 = vmatprep.subr.bf16.mxu0 0
        %1805 = vmatpush1.bf16.msra.mxu0 0
        %1806 = vmatprep.subr.bf16.mxu0 0
        %1807 = vmatpush1.bf16.msra.mxu0 0
        %1808 = vmatprep.subr.bf16.mxu0 0
        %1809 = vmatpush1.bf16.msra.mxu0 0
        %1810 = vmatprep.subr.bf16.mxu0 0
        %1811 = vmatpush1.bf16.msra.mxu0 0
        %1812 = vmatprep.subr.bf16.mxu0 0
        %1813 = vmatpush1.bf16.msra.mxu0 0
        %1814 = vmatprep.subr.bf16.mxu0 0
        %1815 = vmatpush1.bf16.msra.mxu0 0
        %1816 = vmatprep.subr.bf16.mxu0 0
        %1817 = vmatpush1.bf16.msra.mxu0 0
        %1818 = vmatprep.subr.bf16.mxu0 0
        %1819 = vmatpush1.bf16.msra.mxu0 0
        %1820 = vmatprep.subr.bf16.mxu0 0
        %1821 = vmatpush1.bf16.msra.mxu0 0
        %1822 = vmatprep.mubr.bf16.mxu0 0
        %1823 = vmatmul.mubr.bf16.gmra.mrb[0].mxu0 %v1788
        %v1824 = vpop.f32.mrb[0].mxu0
        %v1825 = vadd.f32 %v1774, %v1824
        %v1826 = vpop.f32.mrb[0].mxu0
        %v1827 = vpop.f32.mrb[0].mxu0
        %v1828 = vpop.f32.mrb[0].mxu0
        %1829 = vdwg.mxu0
        %v1830 = vadd.f32 %v1182, %v1825
        %v1831 = vsel %vm547, %v1830, 0.0
        %1832 = vadd.xlane.f32.xlu0 %v1831
        %v1833 = vpop.xlane.xlu0 %1832
        %v1834 = vmul.f32 %v1833, %v551
        %v1835 = vsub.f32 %v1830, %v1834
        %v1836 = vmul.f32 %v1835, %v1835
        %v1837 = vsel %vm547, %v1836, 0.0
        %1838 = vadd.xlane.f32.xlu0 %v1837
        %v1839 = vpop.xlane.xlu0 %1838
        %v1840 = vmul.f32 %v1839, %v551
        %v1841 = vadd.f32 %v1840, 1e-05
        %v1842 = vrsqrt.pop %v1841
        %v1843 = vmul.f32 %v1835, %v1842
        %v1844 = vlaneseq
        %v1845 = vshrl.u32 %v1844, 7
        %v1846 = vsub.s32 4, %v1845
        %v1847 = vrot.slane %v542, %v1846
        %v1848 = vmul.f32 %v1843, %v1847
        %v1849 = vlaneseq
        %v1850 = vshrl.u32 %v1849, 7
        %v1851 = vsub.s32 5, %v1850
        %v1852 = vrot.slane %v542, %v1851
        %v1853 = vadd.f32 %v1848, %v1852
        %v1854 = vpack.c.bf16 %v1853, %v1853
        %v1855 = vld [vmem:[#allocation11] sm:$0xf]
        %v1856 = vld [vmem:[#allocation11 + $0x4] sm:$0xf]
        %v1857 = vld [vmem:[#allocation11 + $0x8] sm:$0xf]
        %v1858 = vld [vmem:[#allocation11 + $0xc] sm:$0xf]
        %v1860 = vlaneseq
        %v1861 = vshrl.u32 %v1860, 7
        %v1862 = vsub.s32 0, %v1861
        %v1863 = vrot.slane %v544, %v1862
        %v1869 = vunpack.c.l.b16 %v1855
        %v1870 = vunpack.c.l.b16 %v1856
        %v1871 = vunpack.c.l.b16 %v1857
        %v1872 = vunpack.c.l.b16 %v1858
        %v1873 = vpack.c.b16 %v1870, %v1869
        %v1874 = vpack.c.b16 %v1872, %v1871
        %v1878 = vsel %vm547, %v1854, 0
        %1880 = vmatprep.subr.bf16.mxu0 0
        %1881 = vmatpush1.bf16.msra.mxu0 %v1873
        %1882 = vmatprep.subr.bf16.mxu0 0
        %1883 = vmatpush1.bf16.msra.mxu0 %v1874
        %1884 = vmatprep.subr.bf16.mxu0 0
        %1885 = vmatpush1.bf16.msra.mxu0 0
        %1886 = vmatprep.subr.bf16.mxu0 0
        %1887 = vmatpush1.bf16.msra.mxu0 0
        %1888 = vmatprep.subr.bf16.mxu0 0
        %1889 = vmatpush1.bf16.msra.mxu0 0
        %1890 = vmatprep.subr.bf16.mxu0 0
        %1891 = vmatpush1.bf16.msra.mxu0 0
        %1892 = vmatprep.subr.bf16.mxu0 0
        %1893 = vmatpush1.bf16.msra.mxu0 0
        %1894 = vmatprep.subr.bf16.mxu0 0
        %1895 = vmatpush1.bf16.msra.mxu0 0
        %1896 = vmatprep.subr.bf16.mxu0 0
        %1897 = vmatpush1.bf16.msra.mxu0 0
        %1898 = vmatprep.subr.bf16.mxu0 0
        %1899 = vmatpush1.bf16.msra.mxu0 0
        %1900 = vmatprep.subr.bf16.mxu0 0
        %1901 = vmatpush1.bf16.msra.mxu0 0
        %1902 = vmatprep.subr.bf16.mxu0 0
        %1903 = vmatpush1.bf16.msra.mxu0 0
        %1904 = vmatprep.subr.bf16.mxu0 0
        %1905 = vmatpush1.bf16.msra.mxu0 0
        %1906 = vmatprep.subr.bf16.mxu0 0
        %1907 = vmatpush1.bf16.msra.mxu0 0
        %1908 = vmatprep.subr.bf16.mxu0 0
        %1909 = vmatpush1.bf16.msra.mxu0 0
        %1910 = vmatprep.subr.bf16.mxu0 0
        %1911 = vmatpush1.bf16.msra.mxu0 0
        %1912 = vmatprep.mubr.bf16.mxu0 0
        %1913 = vmatmul.mubr.bf16.gmra.mrb[0].mxu0 %v1878
        %v1914 = vpop.f32.mrb[0].mxu0
        %v1915 = vadd.f32 %v1863, %v1914
        %v1916 = vpop.f32.mrb[0].mxu0
        %v1917 = vpop.f32.mrb[0].mxu0
        %v1918 = vpop.f32.mrb[0].mxu0
        %1919 = vdwg.mxu0
        %v1920 = vmax.f32 %v1915, 0.0
        %v1921 = vpack.c.bf16 %v1920, %v1920
        %v1922 = vld [vmem:[%s9] sm:$0xf]
        %v1923 = vld [vmem:[%s9 + $0x4] sm:$0xf]
        %v1924 = vld [vmem:[%s9 + $0x8] sm:$0xf]
        %v1925 = vld [vmem:[%s9 + $0xc] sm:$0xf]
        %v1926 = vld [vmem:[%s9 + $0x10] sm:$0xf]
        %v1927 = vld [vmem:[%s9 + $0x14] sm:$0xf]
        %v1928 = vld [vmem:[%s9 + $0x18] sm:$0xf]
        %v1929 = vld [vmem:[%s9 + $0x1c] sm:$0xf]
        %v1930 = vlaneseq
        %v1931 = vshrl.u32 %v1930, 7
        %v1932 = vsub.s32 0, %v1931
        %v1933 = vrot.slane %v543, %v1932
        %v1942 = vunpack.c.l.b16 %v1922
        %v1943 = vunpack.c.l.b16 %v1923
        %v1944 = vunpack.c.l.b16 %v1924
        %v1945 = vunpack.c.l.b16 %v1925
        %v1946 = vunpack.c.l.b16 %v1926
        %v1947 = vunpack.c.l.b16 %v1927
        %v1948 = vunpack.c.l.b16 %v1928
        %v1949 = vunpack.c.l.b16 %v1929
        %v1950 = vpack.c.b16 %v1943, %v1942
        %v1951 = vpack.c.b16 %v1945, %v1944
        %v1952 = vpack.c.b16 %v1947, %v1946
        %v1953 = vpack.c.b16 %v1949, %v1948
        %vm1958 = vcmask 523264
        %v1960 = vsel %vm1958, %v1921, 0
        %1962 = vmatprep.subr.bf16.mxu0 0
        %1963 = vmatpush1.bf16.msra.mxu0 %v1950
        %1964 = vmatprep.subr.bf16.mxu0 0
        %1965 = vmatpush1.bf16.msra.mxu0 %v1951
        %1966 = vmatprep.subr.bf16.mxu0 0
        %1967 = vmatpush1.bf16.msra.mxu0 %v1952
        %1968 = vmatprep.subr.bf16.mxu0 0
        %1969 = vmatpush1.bf16.msra.mxu0 %v1953
        %1970 = vmatprep.subr.bf16.mxu0 0
        %1971 = vmatpush1.bf16.msra.mxu0 0
        %1972 = vmatprep.subr.bf16.mxu0 0
        %1973 = vmatpush1.bf16.msra.mxu0 0
        %1974 = vmatprep.subr.bf16.mxu0 0
        %1975 = vmatpush1.bf16.msra.mxu0 0
        %1976 = vmatprep.subr.bf16.mxu0 0
        %1977 = vmatpush1.bf16.msra.mxu0 0
        %1978 = vmatprep.subr.bf16.mxu0 0
        %1979 = vmatpush1.bf16.msra.mxu0 0
        %1980 = vmatprep.subr.bf16.mxu0 0
        %1981 = vmatpush1.bf16.msra.mxu0 0
        %1982 = vmatprep.subr.bf16.mxu0 0
        %1983 = vmatpush1.bf16.msra.mxu0 0
        %1984 = vmatprep.subr.bf16.mxu0 0
        %1985 = vmatpush1.bf16.msra.mxu0 0
        %1986 = vmatprep.subr.bf16.mxu0 0
        %1987 = vmatpush1.bf16.msra.mxu0 0
        %1988 = vmatprep.subr.bf16.mxu0 0
        %1989 = vmatpush1.bf16.msra.mxu0 0
        %1990 = vmatprep.subr.bf16.mxu0 0
        %1991 = vmatpush1.bf16.msra.mxu0 0
        %1992 = vmatprep.subr.bf16.mxu0 0
        %1993 = vmatpush1.bf16.msra.mxu0 0
        %1994 = vmatprep.mubr.bf16.mxu0 0
        %1995 = vmatmul.mubr.bf16.gmra.mrb[0].mxu0 %v1960
        %v1996 = vpop.f32.mrb[0].mxu0
        %v1997 = vadd.f32 %v1933, %v1996
        %v1998 = vpop.f32.mrb[0].mxu0
        %v1999 = vpop.f32.mrb[0].mxu0
        %v2000 = vpop.f32.mrb[0].mxu0
        %2001 = vdwg.mxu0
        %v2002 = vadd.f32 %v1853, %v1997
        %2003 = vst.msk [vmem:[%s530] sm:$0xff] %vm547, %v2002
        %s2004 = sand.u32 %s322, 1
        %s2005 = scalar_lea.sflag [#allocation4], %s2004
        %s2006 = sand.u32 %s322, 1
        %s2007 = smul.addr %s2006, 8
        %s2008 = scalar_lea.vmem [#allocation13], %s2007
        // Predicated region
        $region97: #{tpu_custom_call.1} parent=71 // pred_check
          %p2009 = pneg %p332
        $region98: #{tpu_custom_call.1} parent=71 // pred_check_branch
          %2011 = sbr.rel (%p2009) target = $region100
        $region99: #{tpu_custom_call.1} parent=71 // pred_region
          %s2013 = ssub.s32 128, 128
          %2014 = vsyncadd %s2005, %s2013
          %s2015 = smul.addr %s31, 128
          %s2016 = scalar_lea.hbm %s13, %s2015
          %s2018 = sshll.u32 %s2008, 4
          %s2019 = int_to_ptr.vmem [resolvable:$true] %s2018
          %2021 = dma.vmem_to_hbm [thread:$0]  %s2019, 128, %s2016, %s2005
        $region100: #{tpu_custom_call.1} parent=71 // pred_fallthru
          _
      $region72: #{tpu_custom_call.1} parent=5 // pred_fallthru
        _
      %p2022 = scmp.le.s32.totalorder 2, %s26
      // Predicated region
      $region101: #{tpu_custom_call.1} parent=5 // pred_check
        %p2023 = pneg %p2022
      $region102: #{tpu_custom_call.1} parent=5 // pred_check_branch
        %2025 = sbr.rel (%p2023) target = $region104
      $region103: #{tpu_custom_call.1} parent=5 // pred_region
        %s2026 = ssub.s32 %s26, 2
        // Predicated region
        $region105: #{tpu_custom_call.1} parent=103 // pred_check
          %p2027 = pneg %p338
        $region106: #{tpu_custom_call.1} parent=103 // pred_check_branch
          %2029 = sbr.rel (%p2027) target = $region108
        $region107: #{tpu_custom_call.1} parent=103 // pred_region
          %s2030 = sand.u32 %s323, 1
          %s2031 = scalar_lea.sflag [#allocation4], %s2030
          %s2032 = sand.u32 %s323, 1
          %s2033 = smul.addr %s2032, 8
          %s2034 = scalar_lea.vmem [#allocation13], %s2033
          %2035 = dma.done %s2031, 128
        $region108: #{tpu_custom_call.1} parent=103 // pred_fallthru
          _
      $region104: #{tpu_custom_call.1} parent=5 // pred_fallthru
        _
    $region6: #{tpu_custom_call.1} parent=1 // loop_footer
      %s30 = sadd.s32 1, %s26
    $region7: #{tpu_custom_call.1} parent=1 // loop_footer_branch
      %25 = sbr.rel target = $region3
    $region8: #{tpu_custom_call.1} parent=1 // loop_exit
      _
    %2036 = vsyncpa [#allocation3], 1
    %s2037 = scalar_lea.sflag [#allocation3], 1
    %2038 = vsyncpa %s2037, 1
    %2039 = vsyncpa [#allocation6], 1
    %2040 = vsyncpa [#allocation9], 1
    %2041 = vsyncpa [#allocation12], 1
    %2042 = vsyncpa [#allocation4], 1
    %s2043 = scalar_lea.sflag [#allocation4], 1
    %2044 = vsyncpa %s2043, 1

</llo_original>
